<compile_context>
chip_gen: v7x
topology: tpu7x:2x2x1
jax: 0.10.0
libtpu: 0.0.40
codegen_flags: <defaults>
</compile_context>

<pallas_src>
from functools import partial

import jax
import jax.numpy as jnp
from jax import lax
from jax.experimental import pallas as pl
from jax.experimental.pallas import tpu as pltpu

LANE = 128      # vreg lane width  -> packed gate tile width GP
SUBLANE = 8     # f32 sublane count -> padded batch size BP
GATE_ORDER = (0, 1, 3, 2)   # LSTM order [i, f, g, o] -> packed order [i, f, o, g]


def bilstm_kernel(x_ref,       # (T*BP, E)   bf16 embedded tokens, time-major
                  wih_ref,     # (E, 2*GP)   bf16 [fwd i,f,o,g | bwd i,f,o,g]
                  b_ref,       # (1, 2*GP)   f32  b_ih + b_hh, both directions
                  whh_f_ref,   # (GP, GP)    bf16 (rows >= H are zero)
                  whh_b_ref,   # (GP, GP)    bf16
                  wlin_f_ref,  # (1, GP)     f32  linear-head weights (fwd half)
                  wlin_b_ref,  # (1, GP)     f32  linear-head weights (bwd half)
                  blin_ref,    # (1, 1)      f32
                  out_ref,     # (BP, GP)    f32 lane-dense slab; answer in lane 0
                  xp_f_ref,    # VMEM scratch (T, BP, GP) f32
                  xp_b_ref,    # VMEM scratch (T, BP, GP) f32
                  *, hidden_size: int):
    T = xp_f_ref.shape[0]
    BP = out_ref.shape[0]
    GP = whh_f_ref.shape[1]
    H = hidden_size

    # ---- Hoisted input projection for both directions (+bias): ONE bf16 MXU
    # matmul with f32 accumulation, split/stored per timestep (static slices).
    proj = (jnp.dot(x_ref[...], wih_ref[...], preferred_element_type=jnp.float32)
            + b_ref[...])                                   # (T*BP, 2*GP) f32
    for t in range(T):                                      # static, tile-aligned
        blk = proj[t * BP:(t + 1) * BP, :]
        xp_f_ref[t] = blk[:, :GP]
        xp_b_ref[t] = blk[:, GP:]
    # TODO(synk): for BP >= 16 store xp_f/xp_b in bf16 (halves scratch VMEM); at
    # BP=8 bf16 slabs pad to (16,128) native tiles so there is no saving.

    zeros = jnp.zeros((BP, GP), jnp.float32)
    lane = lax.broadcasted_iota(jnp.int32, (BP, GP), 1)
    sig_mask = lane < 3 * H        # lanes [0,3H): i,f,o -> sigmoid; [3H,..): g -> tanh

    def cell(gates, c):
        # Single EUP tanh per direction per step:
        #   sigmoid(x) = 0.5*(tanh(0.5*x)+1)  on the i,f,o lanes
        #   tanh(x)                            on the g lanes
        t_act = jnp.tanh(jnp.where(sig_mask, 0.5 * gates, gates))
        act = jnp.where(sig_mask, 0.5 * (t_act + 1.0), t_act)
        # Align f,o,g onto lanes [0,H) with XLU rotations (i is already there).
        f_g = pltpu.roll(act, GP - H, 1)
        o_g = pltpu.roll(act, GP - 2 * H, 1)
        g_g = pltpu.roll(act, GP - 3 * H, 1)
        # Lanes >= H carry bounded garbage; whh rows >= H and wlin lanes >= H are
        # zero, so it never feeds back into the valid lanes.
        c_new = f_g * c + act * g_g
        h_new = o_g * jnp.tanh(c_new)
        return h_new, c_new

    # ---- Fused forward+backward recurrence: one loop advances both directions,
    # state kept in f32, only the matmul operand is cast to bf16.
    def step(t, carry):
        h_f, c_f, h_b, c_b, acc_f, acc_b = carry
        gx_f = xp_f_ref[t]                                   # (BP, GP) f32
        gx_b = xp_b_ref[T - 1 - t]
        gates_f = gx_f + jnp.dot(h_f.astype(jnp.bfloat16), whh_f_ref[...],
                                 preferred_element_type=jnp.float32)
        gates_b = gx_b + jnp.dot(h_b.astype(jnp.bfloat16), whh_b_ref[...],
                                 preferred_element_type=jnp.float32)
        h_f, c_f = cell(gates_f, c_f)
        h_b, c_b = cell(gates_b, c_b)
        return h_f, c_f, h_b, c_b, acc_f + h_f, acc_b + h_b

    carry = (zeros, zeros, zeros, zeros, zeros, zeros)
    _, _, _, _, sum_f, sum_b = lax.fori_loop(
        0, T, step, carry, unroll=True if T <= 16 else 4)

    # ---- Mean pool + linear head: one merged VPU multiply-add, one XLU lane
    # reduction, 1/T folded into a single scalar multiply.
    inv_t = jnp.float32(1.0 / T)
    merged = sum_f * wlin_f_ref[...] + sum_b * wlin_b_ref[...]
    head = merged.sum(axis=-1, keepdims=True) * inv_t + blin_ref[...]   # (BP, 1)
    out_ref[...] = jnp.broadcast_to(head, (BP, GP))          # unmasked 128-lane store


# --------------------------- host-side param prep ----------------------------
def _pack_gates(w, H):
    """(rows, 4H) in [i|f|g|o] order -> (rows, LANE) packed [i|f|o|g], zero-padded."""
    rows = w.shape[0]
    out = jnp.zeros((rows, LANE), jnp.float32)
    for dst, src in enumerate(GATE_ORDER):
        out = out.at[:, dst * H:(dst + 1) * H].set(
            w[:, src * H:(src + 1) * H].astype(jnp.float32))
    return out


def prepare_params(params):
    """One-time repacking of PyTorch-layout params into the kernel layout.
    Hoisted out of the jitted forward so it does not rerun per call."""
    H = params["whh_f"].shape[0]
    if 4 * H > LANE:
        # TODO(synk): fall back to one 128-lane tile per gate when H > 32.
        raise NotImplementedError("gate packing requires 4*hidden_size <= 128")

    wih = jnp.concatenate([_pack_gates(params["wih_f"], H),
                           _pack_gates(params["wih_b"], H)], axis=1)   # (E, 2*GP)
    b = jnp.concatenate([_pack_gates(params["b_f"], H),
                         _pack_gates(params["b_b"], H)], axis=1)       # (1, 2*GP)
    whh_f = jnp.zeros((LANE, LANE), jnp.float32).at[:H, :].set(
        _pack_gates(params["whh_f"], H))
    whh_b = jnp.zeros((LANE, LANE), jnp.float32).at[:H, :].set(
        _pack_gates(params["whh_b"], H))
    wlin = params["wlin"].astype(jnp.float32)                          # (2H, 1)
    wlin_f = jnp.zeros((1, LANE), jnp.float32).at[0, :H].set(wlin[:H, 0])
    wlin_b = jnp.zeros((1, LANE), jnp.float32).at[0, :H].set(wlin[H:, 0])

    prepared = {
        "embedding": params["embedding"].astype(jnp.float32),
        "wih": wih.astype(jnp.bfloat16),        # MXU operands in bf16
        "b": b,                                 # bias stays f32
        "whh_f": whh_f.astype(jnp.bfloat16),
        "whh_b": whh_b.astype(jnp.bfloat16),
        "wlin_f": wlin_f,
        "wlin_b": wlin_b,
        "blin": params["blin"].astype(jnp.float32),
    }
    return prepared, H


@partial(jax.jit, static_argnames=("hidden_size",))
def bilstm_forward(tokens, prepared, *, hidden_size):
    """tokens: (B, T) int32. Returns (B, 1) f32."""
    emb = prepared["embedding"]                              # (V, E) f32
    B, T = tokens.shape
    E = emb.shape[1]
    GP = LANE
    BP = max(((B + SUBLANE - 1) // SUBLANE) * SUBLANE, SUBLANE)

    # XLA-side glue: embedding gather, batch pad to the sublane count, time-major
    # flatten, and bf16 cast of the MXU operand.
    # TODO(synk): for large vocab/seq, move the gather in-kernel via scalar
    # prefetch and stream x over a time-block grid axis instead of whole-sequence
    # VMEM residency (matters first on v7x's 64 MiB VMEM).
    x = jnp.take(emb, tokens, axis=0)                        # (B, T, E)
    x = jnp.transpose(x, (1, 0, 2))                          # (T, B, E)
    x = jnp.pad(x, ((0, 0), (0, BP - B), (0, 0)))            # (T, BP, E)
    x = x.reshape(T * BP, E).astype(jnp.bfloat16)

    inputs = (x, prepared["wih"], prepared["b"], prepared["whh_f"],
              prepared["whh_b"], prepared["wlin_f"], prepared["wlin_b"],
              prepared["blin"])
    scratch = [pltpu.VMEM((T, BP, GP), jnp.float32),
               pltpu.VMEM((T, BP, GP), jnp.float32)]

    # Scoped-VMEM limit sized from the actual footprint (v5e default is 16 MiB,
    # v6e/v7x 32 MiB); capped at 64 MiB so it is also v7x-physical-safe.
    footprint = sum(a.size * a.dtype.itemsize for a in inputs)
    footprint += 2 * T * BP * GP * 4 + BP * GP * 4
    vmem_limit = int(min(64 << 20, max(16 << 20, 2 * footprint + (4 << 20))))

    vmem = pl.BlockSpec(memory_space=pltpu.MemorySpace.VMEM)
    # TODO(synk): on v7x, split the fwd/bwd recurrences across the two
    # TensorCores via a size-2 "parallel" grid axis; the fused single-loop form
    # kept here is what hides MXU/EUP latency on single-TC v5e/v6e.
    out = pl.pallas_call(
        partial(bilstm_kernel, hidden_size=hidden_size),
        out_shape=jax.ShapeDtypeStruct((BP, GP), jnp.float32),
        in_specs=[vmem] * len(inputs),
        out_specs=vmem,
        scratch_shapes=scratch,
        compiler_params=pltpu.CompilerParams(vmem_limit_bytes=vmem_limit),
    )(*inputs)

    return out[:B, :1]


# ---------------- pure-JAX reference (for correctness check) -----------------
def _lstm_dir_ref(x_tbe, wih, whh, b, H):
    B = x_tbe.shape[1]

    def step(carry, x_t):
        h, c = carry
        gates = x_t @ wih + h @ whh + b
        i = jax.nn.sigmoid(gates[:, 0:H])
        f = jax.nn.sigmoid(gates[:, H:2 * H])
        g = jnp.tanh(gates[:, 2 * H:3 * H])
        o = jax.nn.sigmoid(gates[:, 3 * H:4 * H])
        c = f * c + i * g
        h = o * jnp.tanh(c)
        return (h, c), h

    init = (jnp.zeros((B, H), jnp.float32), jnp.zeros((B, H), jnp.float32))
    _, hs = lax.scan(step, init, x_tbe)
    return hs                                               # (T, B, H)


def bilstm_reference(tokens, params, H):
    emb = params["embedding"]
    embedded = jnp.take(emb, tokens, axis=0)                # (B, T, E)
    x_tbe = jnp.transpose(embedded, (1, 0, 2)).astype(jnp.float32)
    hs_f = _lstm_dir_ref(x_tbe, params["wih_f"], params["whh_f"], params["b_f"][0], H)
    hs_b = _lstm_dir_ref(x_tbe[::-1], params["wih_b"], params["whh_b"], params["b_b"][0], H)
    pooled = jnp.concatenate([hs_f.mean(axis=0), hs_b.mean(axis=0)], axis=-1)
    return pooled @ params["wlin"] + params["blin"]


# ---------------------------- parameter setup --------------------------------
def make_params(key, vocab, E, H, pad_idx=0):
    ks = jax.random.split(key, 12)
    bound = 1.0 / jnp.sqrt(jnp.float32(H))

    def u(k, shape):
        return jax.random.uniform(k, shape, jnp.float32, -bound, bound)

    # NOTE: the reference module loads an all-zeros pretrained embedding matrix;
    # here we use a deterministic random embedding (padding row zeroed) so the
    # kernel exercises a non-degenerate path.
    embedding = jax.random.normal(ks[0], (vocab, E), jnp.float32) * 0.1
    embedding = embedding.at[pad_idx].set(0.0)

    # PyTorch stores weight_ih as (4H, E) / weight_hh as (4H, H); we transpose.
    params = {
        "embedding": embedding,
        "wih_f": u(ks[1], (E, 4 * H)),
        "whh_f": u(ks[2], (H, 4 * H)),
        "b_f": (u(ks[3], (1, 4 * H)) + u(ks[4], (1, 4 * H))),   # b_ih + b_hh
        "wih_b": u(ks[5], (E, 4 * H)),
        "whh_b": u(ks[6], (H, 4 * H)),
        "b_b": (u(ks[7], (1, 4 * H)) + u(ks[8], (1, 4 * H))),
        # nn.Linear(2H, 1): weight (1, 2H) -> transpose to (2H, 1)
        "wlin": u(ks[9], (2 * H, 1)),
        "blin": u(ks[10], (1, 1)),
    }
    return params


if __name__ == "__main__":
    B, T, E, H, VOCAB, PAD = 2, 8, 200, 32, 50, 0

    key = jax.random.PRNGKey(0)
    k_tok, k_par = jax.random.split(key)
    tokens = jax.random.randint(k_tok, (B, T), 1, VOCAB, dtype=jnp.int32)
    params = make_params(k_par, VOCAB, E, H, pad_idx=PAD)

    prepared, hidden = prepare_params(params)     # one-time host-side repacking
    out = jax.block_until_ready(bilstm_forward(tokens, prepared, hidden_size=hidden))
    assert out.shape == (B, 1) and out.dtype == jnp.float32

    ref = jax.block_until_ready(bilstm_reference(tokens, params, H))
    # bf16 MXU operands (f32 accumulation/state) -> mixed-precision tolerance
    # against the pure-f32 scan reference.
    assert jnp.allclose(out, ref, atol=2e-2, rtol=2e-2), (out, ref)

    print("KERNEL_OK")
</pallas_src>

<mosaic_0001>
module attributes {stable_mosaic.version = 11 : i64} {
  func.func @bilstm_kernel(%arg0: memref<64x200xbf16, #tpu.memory_space<vmem>>, %arg1: memref<200x256xbf16, #tpu.memory_space<vmem>>, %arg2: memref<1x256xf32, #tpu.memory_space<vmem>>, %arg3: memref<128x128xbf16, #tpu.memory_space<vmem>>, %arg4: memref<128x128xbf16, #tpu.memory_space<vmem>>, %arg5: memref<1x128xf32, #tpu.memory_space<vmem>>, %arg6: memref<1x128xf32, #tpu.memory_space<vmem>>, %arg7: memref<1x1xf32, #tpu.memory_space<vmem>>, %arg8: memref<8x128xf32, #tpu.memory_space<vmem>>, %arg9: memref<8x8x128xf32, #tpu.memory_space<vmem>>, %arg10: memref<8x8x128xf32, #tpu.memory_space<vmem>>) attributes {dimension_semantics = [], scalar_prefetch = 0 : i64, scratch_operands = 2 : i64, tpu.core_type = #tpu.core_type<tc>} {
    %c0 = arith.constant 0 : index
    %c0_0 = arith.constant 0 : index
    %0 = vector.load %arg0[%c0, %c0_0] : memref<64x200xbf16, #tpu.memory_space<vmem>>, vector<64x200xbf16>
    %c0_1 = arith.constant 0 : index
    %c0_2 = arith.constant 0 : index
    %1 = vector.load %arg1[%c0_1, %c0_2] : memref<200x256xbf16, #tpu.memory_space<vmem>>, vector<200x256xbf16>
    %cst = arith.constant dense<0.000000e+00> : vector<64x256xf32>
    %2 = tpu.matmul %0, %1, %cst {dimension_numbers = #tpu.dot_dimension_numbers<[1], [0], [0], [1], [0, 0, 1, 1], [], []>} : vector<64x200xbf16>, vector<200x256xbf16>, vector<64x256xf32> -> vector<64x256xf32>
    %c0_3 = arith.constant 0 : index
    %c0_4 = arith.constant 0 : index
    %3 = vector.load %arg2[%c0_3, %c0_4] : memref<1x256xf32, #tpu.memory_space<vmem>>, vector<1x256xf32>
    %4 = vector.broadcast %3 : vector<1x256xf32> to vector<64x256xf32>
    %5 = arith.addf %2, %4 : vector<64x256xf32>
    %6 = vector.extract_strided_slice %5 {offsets = [0, 0], sizes = [8, 256], strides = [1, 1]} : vector<64x256xf32> to vector<8x256xf32>
    %7 = vector.extract_strided_slice %6 {offsets = [0, 0], sizes = [8, 128], strides = [1, 1]} : vector<8x256xf32> to vector<8x128xf32>
    %c0_5 = arith.constant 0 : index
    %c0_6 = arith.constant 0 : index
    %c0_7 = arith.constant 0 : index
    %8 = vector.load %arg9[%c0_5, %c0_6, %c0_7] : memref<8x8x128xf32, #tpu.memory_space<vmem>>, vector<1x8x128xf32>
    %9 = vector.shape_cast %8 : vector<1x8x128xf32> to vector<8x128xf32>
    %10 = vector.shape_cast %7 : vector<8x128xf32> to vector<1x8x128xf32>
    tpu.vector_store %arg9[%c0_5, %c0_6, %c0_7], %10 {strides = array<i32>} : memref<8x8x128xf32, #tpu.memory_space<vmem>>, vector<1x8x128xf32>,
    %11 = vector.extract_strided_slice %6 {offsets = [0, 128], sizes = [8, 128], strides = [1, 1]} : vector<8x256xf32> to vector<8x128xf32>
    %c0_8 = arith.constant 0 : index
    %c0_9 = arith.constant 0 : index
    %c0_10 = arith.constant 0 : index
    %12 = vector.load %arg10[%c0_8, %c0_9, %c0_10] : memref<8x8x128xf32, #tpu.memory_space<vmem>>, vector<1x8x128xf32>
    %13 = vector.shape_cast %12 : vector<1x8x128xf32> to vector<8x128xf32>
    %14 = vector.shape_cast %11 : vector<8x128xf32> to vector<1x8x128xf32>
    tpu.vector_store %arg10[%c0_8, %c0_9, %c0_10], %14 {strides = array<i32>} : memref<8x8x128xf32, #tpu.memory_space<vmem>>, vector<1x8x128xf32>,
    %15 = vector.extract_strided_slice %5 {offsets = [8, 0], sizes = [8, 256], strides = [1, 1]} : vector<64x256xf32> to vector<8x256xf32>
    %16 = vector.extract_strided_slice %15 {offsets = [0, 0], sizes = [8, 128], strides = [1, 1]} : vector<8x256xf32> to vector<8x128xf32>
    %c1 = arith.constant 1 : index
    %c0_11 = arith.constant 0 : index
    %c0_12 = arith.constant 0 : index
    %17 = vector.load %arg9[%c1, %c0_11, %c0_12] : memref<8x8x128xf32, #tpu.memory_space<vmem>>, vector<1x8x128xf32>
    %18 = vector.shape_cast %17 : vector<1x8x128xf32> to vector<8x128xf32>
    %19 = vector.shape_cast %16 : vector<8x128xf32> to vector<1x8x128xf32>
    tpu.vector_store %arg9[%c1, %c0_11, %c0_12], %19 {strides = array<i32>} : memref<8x8x128xf32, #tpu.memory_space<vmem>>, vector<1x8x128xf32>,
    %20 = vector.extract_strided_slice %15 {offsets = [0, 128], sizes = [8, 128], strides = [1, 1]} : vector<8x256xf32> to vector<8x128xf32>
    %c1_13 = arith.constant 1 : index
    %c0_14 = arith.constant 0 : index
    %c0_15 = arith.constant 0 : index
    %21 = vector.load %arg10[%c1_13, %c0_14, %c0_15] : memref<8x8x128xf32, #tpu.memory_space<vmem>>, vector<1x8x128xf32>
    %22 = vector.shape_cast %21 : vector<1x8x128xf32> to vector<8x128xf32>
    %23 = vector.shape_cast %20 : vector<8x128xf32> to vector<1x8x128xf32>
    tpu.vector_store %arg10[%c1_13, %c0_14, %c0_15], %23 {strides = array<i32>} : memref<8x8x128xf32, #tpu.memory_space<vmem>>, vector<1x8x128xf32>,
    %24 = vector.extract_strided_slice %5 {offsets = [16, 0], sizes = [8, 256], strides = [1, 1]} : vector<64x256xf32> to vector<8x256xf32>
    %25 = vector.extract_strided_slice %24 {offsets = [0, 0], sizes = [8, 128], strides = [1, 1]} : vector<8x256xf32> to vector<8x128xf32>
    %c2 = arith.constant 2 : index
    %c0_16 = arith.constant 0 : index
    %c0_17 = arith.constant 0 : index
    %26 = vector.load %arg9[%c2, %c0_16, %c0_17] : memref<8x8x128xf32, #tpu.memory_space<vmem>>, vector<1x8x128xf32>
    %27 = vector.shape_cast %26 : vector<1x8x128xf32> to vector<8x128xf32>
    %28 = vector.shape_cast %25 : vector<8x128xf32> to vector<1x8x128xf32>
    tpu.vector_store %arg9[%c2, %c0_16, %c0_17], %28 {strides = array<i32>} : memref<8x8x128xf32, #tpu.memory_space<vmem>>, vector<1x8x128xf32>,
    %29 = vector.extract_strided_slice %24 {offsets = [0, 128], sizes = [8, 128], strides = [1, 1]} : vector<8x256xf32> to vector<8x128xf32>
    %c2_18 = arith.constant 2 : index
    %c0_19 = arith.constant 0 : index
    %c0_20 = arith.constant 0 : index
    %30 = vector.load %arg10[%c2_18, %c0_19, %c0_20] : memref<8x8x128xf32, #tpu.memory_space<vmem>>, vector<1x8x128xf32>
    %31 = vector.shape_cast %30 : vector<1x8x128xf32> to vector<8x128xf32>
    %32 = vector.shape_cast %29 : vector<8x128xf32> to vector<1x8x128xf32>
    tpu.vector_store %arg10[%c2_18, %c0_19, %c0_20], %32 {strides = array<i32>} : memref<8x8x128xf32, #tpu.memory_space<vmem>>, vector<1x8x128xf32>,
    %33 = vector.extract_strided_slice %5 {offsets = [24, 0], sizes = [8, 256], strides = [1, 1]} : vector<64x256xf32> to vector<8x256xf32>
    %34 = vector.extract_strided_slice %33 {offsets = [0, 0], sizes = [8, 128], strides = [1, 1]} : vector<8x256xf32> to vector<8x128xf32>
    %c3 = arith.constant 3 : index
    %c0_21 = arith.constant 0 : index
    %c0_22 = arith.constant 0 : index
    %35 = vector.load %arg9[%c3, %c0_21, %c0_22] : memref<8x8x128xf32, #tpu.memory_space<vmem>>, vector<1x8x128xf32>
    %36 = vector.shape_cast %35 : vector<1x8x128xf32> to vector<8x128xf32>
    %37 = vector.shape_cast %34 : vector<8x128xf32> to vector<1x8x128xf32>
    tpu.vector_store %arg9[%c3, %c0_21, %c0_22], %37 {strides = array<i32>} : memref<8x8x128xf32, #tpu.memory_space<vmem>>, vector<1x8x128xf32>,
    %38 = vector.extract_strided_slice %33 {offsets = [0, 128], sizes = [8, 128], strides = [1, 1]} : vector<8x256xf32> to vector<8x128xf32>
    %c3_23 = arith.constant 3 : index
    %c0_24 = arith.constant 0 : index
    %c0_25 = arith.constant 0 : index
    %39 = vector.load %arg10[%c3_23, %c0_24, %c0_25] : memref<8x8x128xf32, #tpu.memory_space<vmem>>, vector<1x8x128xf32>
    %40 = vector.shape_cast %39 : vector<1x8x128xf32> to vector<8x128xf32>
    %41 = vector.shape_cast %38 : vector<8x128xf32> to vector<1x8x128xf32>
    tpu.vector_store %arg10[%c3_23, %c0_24, %c0_25], %41 {strides = array<i32>} : memref<8x8x128xf32, #tpu.memory_space<vmem>>, vector<1x8x128xf32>,
    %42 = vector.extract_strided_slice %5 {offsets = [32, 0], sizes = [8, 256], strides = [1, 1]} : vector<64x256xf32> to vector<8x256xf32>
    %43 = vector.extract_strided_slice %42 {offsets = [0, 0], sizes = [8, 128], strides = [1, 1]} : vector<8x256xf32> to vector<8x128xf32>
    %c4 = arith.constant 4 : index
    %c0_26 = arith.constant 0 : index
    %c0_27 = arith.constant 0 : index
    %44 = vector.load %arg9[%c4, %c0_26, %c0_27] : memref<8x8x128xf32, #tpu.memory_space<vmem>>, vector<1x8x128xf32>
    %45 = vector.shape_cast %44 : vector<1x8x128xf32> to vector<8x128xf32>
    %46 = vector.shape_cast %43 : vector<8x128xf32> to vector<1x8x128xf32>
    tpu.vector_store %arg9[%c4, %c0_26, %c0_27], %46 {strides = array<i32>} : memref<8x8x128xf32, #tpu.memory_space<vmem>>, vector<1x8x128xf32>,
    %47 = vector.extract_strided_slice %42 {offsets = [0, 128], sizes = [8, 128], strides = [1, 1]} : vector<8x256xf32> to vector<8x128xf32>
    %c4_28 = arith.constant 4 : index
    %c0_29 = arith.constant 0 : index
    %c0_30 = arith.constant 0 : index
    %48 = vector.load %arg10[%c4_28, %c0_29, %c0_30] : memref<8x8x128xf32, #tpu.memory_space<vmem>>, vector<1x8x128xf32>
    %49 = vector.shape_cast %48 : vector<1x8x128xf32> to vector<8x128xf32>
    %50 = vector.shape_cast %47 : vector<8x128xf32> to vector<1x8x128xf32>
    tpu.vector_store %arg10[%c4_28, %c0_29, %c0_30], %50 {strides = array<i32>} : memref<8x8x128xf32, #tpu.memory_space<vmem>>, vector<1x8x128xf32>,
    %51 = vector.extract_strided_slice %5 {offsets = [40, 0], sizes = [8, 256], strides = [1, 1]} : vector<64x256xf32> to vector<8x256xf32>
    %52 = vector.extract_strided_slice %51 {offsets = [0, 0], sizes = [8, 128], strides = [1, 1]} : vector<8x256xf32> to vector<8x128xf32>
    %c5 = arith.constant 5 : index
    %c0_31 = arith.constant 0 : index
    %c0_32 = arith.constant 0 : index
    %53 = vector.load %arg9[%c5, %c0_31, %c0_32] : memref<8x8x128xf32, #tpu.memory_space<vmem>>, vector<1x8x128xf32>
    %54 = vector.shape_cast %53 : vector<1x8x128xf32> to vector<8x128xf32>
    %55 = vector.shape_cast %52 : vector<8x128xf32> to vector<1x8x128xf32>
    tpu.vector_store %arg9[%c5, %c0_31, %c0_32], %55 {strides = array<i32>} : memref<8x8x128xf32, #tpu.memory_space<vmem>>, vector<1x8x128xf32>,
    %56 = vector.extract_strided_slice %51 {offsets = [0, 128], sizes = [8, 128], strides = [1, 1]} : vector<8x256xf32> to vector<8x128xf32>
    %c5_33 = arith.constant 5 : index
    %c0_34 = arith.constant 0 : index
    %c0_35 = arith.constant 0 : index
    %57 = vector.load %arg10[%c5_33, %c0_34, %c0_35] : memref<8x8x128xf32, #tpu.memory_space<vmem>>, vector<1x8x128xf32>
    %58 = vector.shape_cast %57 : vector<1x8x128xf32> to vector<8x128xf32>
    %59 = vector.shape_cast %56 : vector<8x128xf32> to vector<1x8x128xf32>
    tpu.vector_store %arg10[%c5_33, %c0_34, %c0_35], %59 {strides = array<i32>} : memref<8x8x128xf32, #tpu.memory_space<vmem>>, vector<1x8x128xf32>,
    %60 = vector.extract_strided_slice %5 {offsets = [48, 0], sizes = [8, 256], strides = [1, 1]} : vector<64x256xf32> to vector<8x256xf32>
    %61 = vector.extract_strided_slice %60 {offsets = [0, 0], sizes = [8, 128], strides = [1, 1]} : vector<8x256xf32> to vector<8x128xf32>
    %c6 = arith.constant 6 : index
    %c0_36 = arith.constant 0 : index
    %c0_37 = arith.constant 0 : index
    %62 = vector.load %arg9[%c6, %c0_36, %c0_37] : memref<8x8x128xf32, #tpu.memory_space<vmem>>, vector<1x8x128xf32>
    %63 = vector.shape_cast %62 : vector<1x8x128xf32> to vector<8x128xf32>
    %64 = vector.shape_cast %61 : vector<8x128xf32> to vector<1x8x128xf32>
    tpu.vector_store %arg9[%c6, %c0_36, %c0_37], %64 {strides = array<i32>} : memref<8x8x128xf32, #tpu.memory_space<vmem>>, vector<1x8x128xf32>,
    %65 = vector.extract_strided_slice %60 {offsets = [0, 128], sizes = [8, 128], strides = [1, 1]} : vector<8x256xf32> to vector<8x128xf32>
    %c6_38 = arith.constant 6 : index
    %c0_39 = arith.constant 0 : index
    %c0_40 = arith.constant 0 : index
    %66 = vector.load %arg10[%c6_38, %c0_39, %c0_40] : memref<8x8x128xf32, #tpu.memory_space<vmem>>, vector<1x8x128xf32>
    %67 = vector.shape_cast %66 : vector<1x8x128xf32> to vector<8x128xf32>
    %68 = vector.shape_cast %65 : vector<8x128xf32> to vector<1x8x128xf32>
    tpu.vector_store %arg10[%c6_38, %c0_39, %c0_40], %68 {strides = array<i32>} : memref<8x8x128xf32, #tpu.memory_space<vmem>>, vector<1x8x128xf32>,
    %69 = vector.extract_strided_slice %5 {offsets = [56, 0], sizes = [8, 256], strides = [1, 1]} : vector<64x256xf32> to vector<8x256xf32>
    %70 = vector.extract_strided_slice %69 {offsets = [0, 0], sizes = [8, 128], strides = [1, 1]} : vector<8x256xf32> to vector<8x128xf32>
    %c7 = arith.constant 7 : index
    %c0_41 = arith.constant 0 : index
    %c0_42 = arith.constant 0 : index
    %71 = vector.load %arg9[%c7, %c0_41, %c0_42] : memref<8x8x128xf32, #tpu.memory_space<vmem>>, vector<1x8x128xf32>
    %72 = vector.shape_cast %71 : vector<1x8x128xf32> to vector<8x128xf32>
    %73 = vector.shape_cast %70 : vector<8x128xf32> to vector<1x8x128xf32>
    tpu.vector_store %arg9[%c7, %c0_41, %c0_42], %73 {strides = array<i32>} : memref<8x8x128xf32, #tpu.memory_space<vmem>>, vector<1x8x128xf32>,
    %74 = vector.extract_strided_slice %69 {offsets = [0, 128], sizes = [8, 128], strides = [1, 1]} : vector<8x256xf32> to vector<8x128xf32>
    %c7_43 = arith.constant 7 : index
    %c0_44 = arith.constant 0 : index
    %c0_45 = arith.constant 0 : index
    %75 = vector.load %arg10[%c7_43, %c0_44, %c0_45] : memref<8x8x128xf32, #tpu.memory_space<vmem>>, vector<1x8x128xf32>
    %76 = vector.shape_cast %75 : vector<1x8x128xf32> to vector<8x128xf32>
    %77 = vector.shape_cast %74 : vector<8x128xf32> to vector<1x8x128xf32>
    tpu.vector_store %arg10[%c7_43, %c0_44, %c0_45], %77 {strides = array<i32>} : memref<8x8x128xf32, #tpu.memory_space<vmem>>, vector<1x8x128xf32>,
    %cst_46 = arith.constant 0.000000e+00 : f32
    %78 = vector.broadcast %cst_46 : f32 to vector<8x128xf32>
    %79 = tpu.iota {dimensions = array<i32: 1>} : vector<8x128xi32>
    %c96_i32 = arith.constant 96 : i32
    %80 = vector.broadcast %c96_i32 : i32 to vector<8x128xi32>
    %81 = arith.cmpi slt, %79, %80 : vector<8x128xi32>
    %c0_i32 = arith.constant 0 : i32
    %82 = arith.index_cast %c0_i32 : i32 to index
    %c0_47 = arith.constant 0 : index
    %c0_48 = arith.constant 0 : index
    %83 = vector.load %arg9[%82, %c0_47, %c0_48] : memref<8x8x128xf32, #tpu.memory_space<vmem>>, vector<1x8x128xf32>
    %84 = vector.shape_cast %83 : vector<1x8x128xf32> to vector<8x128xf32>
    %c7_i32 = arith.constant 7 : i32
    %85 = arith.subi %c7_i32, %c0_i32 : i32
    %86 = arith.index_cast %85 : i32 to index
    %c0_49 = arith.constant 0 : index
    %c0_50 = arith.constant 0 : index
    %87 = vector.load %arg10[%86, %c0_49, %c0_50] : memref<8x8x128xf32, #tpu.memory_space<vmem>>, vector<1x8x128xf32>
    %88 = vector.shape_cast %87 : vector<1x8x128xf32> to vector<8x128xf32>
    %89 = arith.truncf %78 : vector<8x128xf32> to vector<8x128xbf16>
    %c0_51 = arith.constant 0 : index
    %c0_52 = arith.constant 0 : index
    %90 = vector.load %arg3[%c0_51, %c0_52] : memref<128x128xbf16, #tpu.memory_space<vmem>>, vector<128x128xbf16>
    %cst_53 = arith.constant dense<0.000000e+00> : vector<8x128xf32>
    %91 = tpu.matmul %89, %90, %cst_53 {dimension_numbers = #tpu.dot_dimension_numbers<[1], [0], [0], [1], [0, 0, 1, 1], [], []>} : vector<8x128xbf16>, vector<128x128xbf16>, vector<8x128xf32> -> vector<8x128xf32>
    %92 = arith.addf %84, %91 : vector<8x128xf32>
    %93 = arith.truncf %78 : vector<8x128xf32> to vector<8x128xbf16>
    %c0_54 = arith.constant 0 : index
    %c0_55 = arith.constant 0 : index
    %94 = vector.load %arg4[%c0_54, %c0_55] : memref<128x128xbf16, #tpu.memory_space<vmem>>, vector<128x128xbf16>
    %cst_56 = arith.constant dense<0.000000e+00> : vector<8x128xf32>
    %95 = tpu.matmul %93, %94, %cst_56 {dimension_numbers = #tpu.dot_dimension_numbers<[1], [0], [0], [1], [0, 0, 1, 1], [], []>} : vector<8x128xbf16>, vector<128x128xbf16>, vector<8x128xf32> -> vector<8x128xf32>
    %96 = arith.addf %88, %95 : vector<8x128xf32>
    %cst_57 = arith.constant 5.000000e-01 : f32
    %97 = vector.broadcast %cst_57 : f32 to vector<8x128xf32>
    %98 = arith.mulf %97, %92 : vector<8x128xf32>
    %99 = arith.select %81, %98, %92 : vector<8x128xi1>, vector<8x128xf32>
    %100 = math.tanh %99 : vector<8x128xf32>
    %cst_58 = arith.constant 1.000000e+00 : f32
    %101 = vector.broadcast %cst_58 : f32 to vector<8x128xf32>
    %102 = arith.addf %100, %101 : vector<8x128xf32>
    %cst_59 = arith.constant 5.000000e-01 : f32
    %103 = vector.broadcast %cst_59 : f32 to vector<8x128xf32>
    %104 = arith.mulf %103, %102 : vector<8x128xf32>
    %105 = arith.select %81, %104, %100 : vector<8x128xi1>, vector<8x128xf32>
    %c96_i32_60 = arith.constant 96 : i32
    %106 = tpu.dynamic_rotate %105 by %c96_i32_60 dim 1 : vector<8x128xf32>, i32 -> vector<8x128xf32>
    %c64_i32 = arith.constant 64 : i32
    %107 = tpu.dynamic_rotate %105 by %c64_i32 dim 1 : vector<8x128xf32>, i32 -> vector<8x128xf32>
    %c32_i32 = arith.constant 32 : i32
    %108 = tpu.dynamic_rotate %105 by %c32_i32 dim 1 : vector<8x128xf32>, i32 -> vector<8x128xf32>
    %109 = arith.mulf %106, %78 : vector<8x128xf32>
    %110 = arith.mulf %105, %108 : vector<8x128xf32>
    %111 = arith.addf %109, %110 : vector<8x128xf32>
    %112 = math.tanh %111 : vector<8x128xf32>
    %113 = arith.mulf %107, %112 : vector<8x128xf32>
    %cst_61 = arith.constant 5.000000e-01 : f32
    %114 = vector.broadcast %cst_61 : f32 to vector<8x128xf32>
    %115 = arith.mulf %114, %96 : vector<8x128xf32>
    %116 = arith.select %81, %115, %96 : vector<8x128xi1>, vector<8x128xf32>
    %117 = math.tanh %116 : vector<8x128xf32>
    %cst_62 = arith.constant 1.000000e+00 : f32
    %118 = vector.broadcast %cst_62 : f32 to vector<8x128xf32>
    %119 = arith.addf %117, %118 : vector<8x128xf32>
    %cst_63 = arith.constant 5.000000e-01 : f32
    %120 = vector.broadcast %cst_63 : f32 to vector<8x128xf32>
    %121 = arith.mulf %120, %119 : vector<8x128xf32>
    %122 = arith.select %81, %121, %117 : vector<8x128xi1>, vector<8x128xf32>
    %c96_i32_64 = arith.constant 96 : i32
    %123 = tpu.dynamic_rotate %122 by %c96_i32_64 dim 1 : vector<8x128xf32>, i32 -> vector<8x128xf32>
    %c64_i32_65 = arith.constant 64 : i32
    %124 = tpu.dynamic_rotate %122 by %c64_i32_65 dim 1 : vector<8x128xf32>, i32 -> vector<8x128xf32>
    %c32_i32_66 = arith.constant 32 : i32
    %125 = tpu.dynamic_rotate %122 by %c32_i32_66 dim 1 : vector<8x128xf32>, i32 -> vector<8x128xf32>
    %126 = arith.mulf %123, %78 : vector<8x128xf32>
    %127 = arith.mulf %122, %125 : vector<8x128xf32>
    %128 = arith.addf %126, %127 : vector<8x128xf32>
    %129 = math.tanh %128 : vector<8x128xf32>
    %130 = arith.mulf %124, %129 : vector<8x128xf32>
    %131 = arith.addf %78, %113 : vector<8x128xf32>
    %132 = arith.addf %78, %130 : vector<8x128xf32>
    %c1_i32 = arith.constant 1 : i32
    %133 = arith.index_cast %c1_i32 : i32 to index
    %c0_67 = arith.constant 0 : index
    %c0_68 = arith.constant 0 : index
    %134 = vector.load %arg9[%133, %c0_67, %c0_68] : memref<8x8x128xf32, #tpu.memory_space<vmem>>, vector<1x8x128xf32>
    %135 = vector.shape_cast %134 : vector<1x8x128xf32> to vector<8x128xf32>
    %c7_i32_69 = arith.constant 7 : i32
    %136 = arith.subi %c7_i32_69, %c1_i32 : i32
    %137 = arith.index_cast %136 : i32 to index
    %c0_70 = arith.constant 0 : index
    %c0_71 = arith.constant 0 : index
    %138 = vector.load %arg10[%137, %c0_70, %c0_71] : memref<8x8x128xf32, #tpu.memory_space<vmem>>, vector<1x8x128xf32>
    %139 = vector.shape_cast %138 : vector<1x8x128xf32> to vector<8x128xf32>
    %140 = arith.truncf %113 : vector<8x128xf32> to vector<8x128xbf16>
    %c0_72 = arith.constant 0 : index
    %c0_73 = arith.constant 0 : index
    %141 = vector.load %arg3[%c0_72, %c0_73] : memref<128x128xbf16, #tpu.memory_space<vmem>>, vector<128x128xbf16>
    %cst_74 = arith.constant dense<0.000000e+00> : vector<8x128xf32>
    %142 = tpu.matmul %140, %141, %cst_74 {dimension_numbers = #tpu.dot_dimension_numbers<[1], [0], [0], [1], [0, 0, 1, 1], [], []>} : vector<8x128xbf16>, vector<128x128xbf16>, vector<8x128xf32> -> vector<8x128xf32>
    %143 = arith.addf %135, %142 : vector<8x128xf32>
    %144 = arith.truncf %130 : vector<8x128xf32> to vector<8x128xbf16>
    %c0_75 = arith.constant 0 : index
    %c0_76 = arith.constant 0 : index
    %145 = vector.load %arg4[%c0_75, %c0_76] : memref<128x128xbf16, #tpu.memory_space<vmem>>, vector<128x128xbf16>
    %cst_77 = arith.constant dense<0.000000e+00> : vector<8x128xf32>
    %146 = tpu.matmul %144, %145, %cst_77 {dimension_numbers = #tpu.dot_dimension_numbers<[1], [0], [0], [1], [0, 0, 1, 1], [], []>} : vector<8x128xbf16>, vector<128x128xbf16>, vector<8x128xf32> -> vector<8x128xf32>
    %147 = arith.addf %139, %146 : vector<8x128xf32>
    %cst_78 = arith.constant 5.000000e-01 : f32
    %148 = vector.broadcast %cst_78 : f32 to vector<8x128xf32>
    %149 = arith.mulf %148, %143 : vector<8x128xf32>
    %150 = arith.select %81, %149, %143 : vector<8x128xi1>, vector<8x128xf32>
    %151 = math.tanh %150 : vector<8x128xf32>
    %cst_79 = arith.constant 1.000000e+00 : f32
    %152 = vector.broadcast %cst_79 : f32 to vector<8x128xf32>
    %153 = arith.addf %151, %152 : vector<8x128xf32>
    %cst_80 = arith.constant 5.000000e-01 : f32
    %154 = vector.broadcast %cst_80 : f32 to vector<8x128xf32>
    %155 = arith.mulf %154, %153 : vector<8x128xf32>
    %156 = arith.select %81, %155, %151 : vector<8x128xi1>, vector<8x128xf32>
    %c96_i32_81 = arith.constant 96 : i32
    %157 = tpu.dynamic_rotate %156 by %c96_i32_81 dim 1 : vector<8x128xf32>, i32 -> vector<8x128xf32>
    %c64_i32_82 = arith.constant 64 : i32
    %158 = tpu.dynamic_rotate %156 by %c64_i32_82 dim 1 : vector<8x128xf32>, i32 -> vector<8x128xf32>
    %c32_i32_83 = arith.constant 32 : i32
    %159 = tpu.dynamic_rotate %156 by %c32_i32_83 dim 1 : vector<8x128xf32>, i32 -> vector<8x128xf32>
    %160 = arith.mulf %157, %111 : vector<8x128xf32>
    %161 = arith.mulf %156, %159 : vector<8x128xf32>
    %162 = arith.addf %160, %161 : vector<8x128xf32>
    %163 = math.tanh %162 : vector<8x128xf32>
    %164 = arith.mulf %158, %163 : vector<8x128xf32>
    %cst_84 = arith.constant 5.000000e-01 : f32
    %165 = vector.broadcast %cst_84 : f32 to vector<8x128xf32>
    %166 = arith.mulf %165, %147 : vector<8x128xf32>
    %167 = arith.select %81, %166, %147 : vector<8x128xi1>, vector<8x128xf32>
    %168 = math.tanh %167 : vector<8x128xf32>
    %cst_85 = arith.constant 1.000000e+00 : f32
    %169 = vector.broadcast %cst_85 : f32 to vector<8x128xf32>
    %170 = arith.addf %168, %169 : vector<8x128xf32>
    %cst_86 = arith.constant 5.000000e-01 : f32
    %171 = vector.broadcast %cst_86 : f32 to vector<8x128xf32>
    %172 = arith.mulf %171, %170 : vector<8x128xf32>
    %173 = arith.select %81, %172, %168 : vector<8x128xi1>, vector<8x128xf32>
    %c96_i32_87 = arith.constant 96 : i32
    %174 = tpu.dynamic_rotate %173 by %c96_i32_87 dim 1 : vector<8x128xf32>, i32 -> vector<8x128xf32>
    %c64_i32_88 = arith.constant 64 : i32
    %175 = tpu.dynamic_rotate %173 by %c64_i32_88 dim 1 : vector<8x128xf32>, i32 -> vector<8x128xf32>
    %c32_i32_89 = arith.constant 32 : i32
    %176 = tpu.dynamic_rotate %173 by %c32_i32_89 dim 1 : vector<8x128xf32>, i32 -> vector<8x128xf32>
    %177 = arith.mulf %174, %128 : vector<8x128xf32>
    %178 = arith.mulf %173, %176 : vector<8x128xf32>
    %179 = arith.addf %177, %178 : vector<8x128xf32>
    %180 = math.tanh %179 : vector<8x128xf32>
    %181 = arith.mulf %175, %180 : vector<8x128xf32>
    %182 = arith.addf %131, %164 : vector<8x128xf32>
    %183 = arith.addf %132, %181 : vector<8x128xf32>
    %c2_i32 = arith.constant 2 : i32
    %184 = arith.index_cast %c2_i32 : i32 to index
    %c0_90 = arith.constant 0 : index
    %c0_91 = arith.constant 0 : index
    %185 = vector.load %arg9[%184, %c0_90, %c0_91] : memref<8x8x128xf32, #tpu.memory_space<vmem>>, vector<1x8x128xf32>
    %186 = vector.shape_cast %185 : vector<1x8x128xf32> to vector<8x128xf32>
    %c7_i32_92 = arith.constant 7 : i32
    %187 = arith.subi %c7_i32_92, %c2_i32 : i32
    %188 = arith.index_cast %187 : i32 to index
    %c0_93 = arith.constant 0 : index
    %c0_94 = arith.constant 0 : index
    %189 = vector.load %arg10[%188, %c0_93, %c0_94] : memref<8x8x128xf32, #tpu.memory_space<vmem>>, vector<1x8x128xf32>
    %190 = vector.shape_cast %189 : vector<1x8x128xf32> to vector<8x128xf32>
    %191 = arith.truncf %164 : vector<8x128xf32> to vector<8x128xbf16>
    %c0_95 = arith.constant 0 : index
    %c0_96 = arith.constant 0 : index
    %192 = vector.load %arg3[%c0_95, %c0_96] : memref<128x128xbf16, #tpu.memory_space<vmem>>, vector<128x128xbf16>
    %cst_97 = arith.constant dense<0.000000e+00> : vector<8x128xf32>
    %193 = tpu.matmul %191, %192, %cst_97 {dimension_numbers = #tpu.dot_dimension_numbers<[1], [0], [0], [1], [0, 0, 1, 1], [], []>} : vector<8x128xbf16>, vector<128x128xbf16>, vector<8x128xf32> -> vector<8x128xf32>
    %194 = arith.addf %186, %193 : vector<8x128xf32>
    %195 = arith.truncf %181 : vector<8x128xf32> to vector<8x128xbf16>
    %c0_98 = arith.constant 0 : index
    %c0_99 = arith.constant 0 : index
    %196 = vector.load %arg4[%c0_98, %c0_99] : memref<128x128xbf16, #tpu.memory_space<vmem>>, vector<128x128xbf16>
    %cst_100 = arith.constant dense<0.000000e+00> : vector<8x128xf32>
    %197 = tpu.matmul %195, %196, %cst_100 {dimension_numbers = #tpu.dot_dimension_numbers<[1], [0], [0], [1], [0, 0, 1, 1], [], []>} : vector<8x128xbf16>, vector<128x128xbf16>, vector<8x128xf32> -> vector<8x128xf32>
    %198 = arith.addf %190, %197 : vector<8x128xf32>
    %cst_101 = arith.constant 5.000000e-01 : f32
    %199 = vector.broadcast %cst_101 : f32 to vector<8x128xf32>
    %200 = arith.mulf %199, %194 : vector<8x128xf32>
    %201 = arith.select %81, %200, %194 : vector<8x128xi1>, vector<8x128xf32>
    %202 = math.tanh %201 : vector<8x128xf32>
    %cst_102 = arith.constant 1.000000e+00 : f32
    %203 = vector.broadcast %cst_102 : f32 to vector<8x128xf32>
    %204 = arith.addf %202, %203 : vector<8x128xf32>
    %cst_103 = arith.constant 5.000000e-01 : f32
    %205 = vector.broadcast %cst_103 : f32 to vector<8x128xf32>
    %206 = arith.mulf %205, %204 : vector<8x128xf32>
    %207 = arith.select %81, %206, %202 : vector<8x128xi1>, vector<8x128xf32>
    %c96_i32_104 = arith.constant 96 : i32
    %208 = tpu.dynamic_rotate %207 by %c96_i32_104 dim 1 : vector<8x128xf32>, i32 -> vector<8x128xf32>
    %c64_i32_105 = arith.constant 64 : i32
    %209 = tpu.dynamic_rotate %207 by %c64_i32_105 dim 1 : vector<8x128xf32>, i32 -> vector<8x128xf32>
    %c32_i32_106 = arith.constant 32 : i32
    %210 = tpu.dynamic_rotate %207 by %c32_i32_106 dim 1 : vector<8x128xf32>, i32 -> vector<8x128xf32>
    %211 = arith.mulf %208, %162 : vector<8x128xf32>
    %212 = arith.mulf %207, %210 : vector<8x128xf32>
    %213 = arith.addf %211, %212 : vector<8x128xf32>
    %214 = math.tanh %213 : vector<8x128xf32>
    %215 = arith.mulf %209, %214 : vector<8x128xf32>
    %cst_107 = arith.constant 5.000000e-01 : f32
    %216 = vector.broadcast %cst_107 : f32 to vector<8x128xf32>
    %217 = arith.mulf %216, %198 : vector<8x128xf32>
    %218 = arith.select %81, %217, %198 : vector<8x128xi1>, vector<8x128xf32>
    %219 = math.tanh %218 : vector<8x128xf32>
    %cst_108 = arith.constant 1.000000e+00 : f32
    %220 = vector.broadcast %cst_108 : f32 to vector<8x128xf32>
    %221 = arith.addf %219, %220 : vector<8x128xf32>
    %cst_109 = arith.constant 5.000000e-01 : f32
    %222 = vector.broadcast %cst_109 : f32 to vector<8x128xf32>
    %223 = arith.mulf %222, %221 : vector<8x128xf32>
    %224 = arith.select %81, %223, %219 : vector<8x128xi1>, vector<8x128xf32>
    %c96_i32_110 = arith.constant 96 : i32
    %225 = tpu.dynamic_rotate %224 by %c96_i32_110 dim 1 : vector<8x128xf32>, i32 -> vector<8x128xf32>
    %c64_i32_111 = arith.constant 64 : i32
    %226 = tpu.dynamic_rotate %224 by %c64_i32_111 dim 1 : vector<8x128xf32>, i32 -> vector<8x128xf32>
    %c32_i32_112 = arith.constant 32 : i32
    %227 = tpu.dynamic_rotate %224 by %c32_i32_112 dim 1 : vector<8x128xf32>, i32 -> vector<8x128xf32>
    %228 = arith.mulf %225, %179 : vector<8x128xf32>
    %229 = arith.mulf %224, %227 : vector<8x128xf32>
    %230 = arith.addf %228, %229 : vector<8x128xf32>
    %231 = math.tanh %230 : vector<8x128xf32>
    %232 = arith.mulf %226, %231 : vector<8x128xf32>
    %233 = arith.addf %182, %215 : vector<8x128xf32>
    %234 = arith.addf %183, %232 : vector<8x128xf32>
    %c3_i32 = arith.constant 3 : i32
    %235 = arith.index_cast %c3_i32 : i32 to index
    %c0_113 = arith.constant 0 : index
    %c0_114 = arith.constant 0 : index
    %236 = vector.load %arg9[%235, %c0_113, %c0_114] : memref<8x8x128xf32, #tpu.memory_space<vmem>>, vector<1x8x128xf32>
    %237 = vector.shape_cast %236 : vector<1x8x128xf32> to vector<8x128xf32>
    %c7_i32_115 = arith.constant 7 : i32
    %238 = arith.subi %c7_i32_115, %c3_i32 : i32
    %239 = arith.index_cast %238 : i32 to index
    %c0_116 = arith.constant 0 : index
    %c0_117 = arith.constant 0 : index
    %240 = vector.load %arg10[%239, %c0_116, %c0_117] : memref<8x8x128xf32, #tpu.memory_space<vmem>>, vector<1x8x128xf32>
    %241 = vector.shape_cast %240 : vector<1x8x128xf32> to vector<8x128xf32>
    %242 = arith.truncf %215 : vector<8x128xf32> to vector<8x128xbf16>
    %c0_118 = arith.constant 0 : index
    %c0_119 = arith.constant 0 : index
    %243 = vector.load %arg3[%c0_118, %c0_119] : memref<128x128xbf16, #tpu.memory_space<vmem>>, vector<128x128xbf16>
    %cst_120 = arith.constant dense<0.000000e+00> : vector<8x128xf32>
    %244 = tpu.matmul %242, %243, %cst_120 {dimension_numbers = #tpu.dot_dimension_numbers<[1], [0], [0], [1], [0, 0, 1, 1], [], []>} : vector<8x128xbf16>, vector<128x128xbf16>, vector<8x128xf32> -> vector<8x128xf32>
    %245 = arith.addf %237, %244 : vector<8x128xf32>
    %246 = arith.truncf %232 : vector<8x128xf32> to vector<8x128xbf16>
    %c0_121 = arith.constant 0 : index
    %c0_122 = arith.constant 0 : index
    %247 = vector.load %arg4[%c0_121, %c0_122] : memref<128x128xbf16, #tpu.memory_space<vmem>>, vector<128x128xbf16>
    %cst_123 = arith.constant dense<0.000000e+00> : vector<8x128xf32>
    %248 = tpu.matmul %246, %247, %cst_123 {dimension_numbers = #tpu.dot_dimension_numbers<[1], [0], [0], [1], [0, 0, 1, 1], [], []>} : vector<8x128xbf16>, vector<128x128xbf16>, vector<8x128xf32> -> vector<8x128xf32>
    %249 = arith.addf %241, %248 : vector<8x128xf32>
    %cst_124 = arith.constant 5.000000e-01 : f32
    %250 = vector.broadcast %cst_124 : f32 to vector<8x128xf32>
    %251 = arith.mulf %250, %245 : vector<8x128xf32>
    %252 = arith.select %81, %251, %245 : vector<8x128xi1>, vector<8x128xf32>
    %253 = math.tanh %252 : vector<8x128xf32>
    %cst_125 = arith.constant 1.000000e+00 : f32
    %254 = vector.broadcast %cst_125 : f32 to vector<8x128xf32>
    %255 = arith.addf %253, %254 : vector<8x128xf32>
    %cst_126 = arith.constant 5.000000e-01 : f32
    %256 = vector.broadcast %cst_126 : f32 to vector<8x128xf32>
    %257 = arith.mulf %256, %255 : vector<8x128xf32>
    %258 = arith.select %81, %257, %253 : vector<8x128xi1>, vector<8x128xf32>
    %c96_i32_127 = arith.constant 96 : i32
    %259 = tpu.dynamic_rotate %258 by %c96_i32_127 dim 1 : vector<8x128xf32>, i32 -> vector<8x128xf32>
    %c64_i32_128 = arith.constant 64 : i32
    %260 = tpu.dynamic_rotate %258 by %c64_i32_128 dim 1 : vector<8x128xf32>, i32 -> vector<8x128xf32>
    %c32_i32_129 = arith.constant 32 : i32
    %261 = tpu.dynamic_rotate %258 by %c32_i32_129 dim 1 : vector<8x128xf32>, i32 -> vector<8x128xf32>
    %262 = arith.mulf %259, %213 : vector<8x128xf32>
    %263 = arith.mulf %258, %261 : vector<8x128xf32>
    %264 = arith.addf %262, %263 : vector<8x128xf32>
    %265 = math.tanh %264 : vector<8x128xf32>
    %266 = arith.mulf %260, %265 : vector<8x128xf32>
    %cst_130 = arith.constant 5.000000e-01 : f32
    %267 = vector.broadcast %cst_130 : f32 to vector<8x128xf32>
    %268 = arith.mulf %267, %249 : vector<8x128xf32>
    %269 = arith.select %81, %268, %249 : vector<8x128xi1>, vector<8x128xf32>
    %270 = math.tanh %269 : vector<8x128xf32>
    %cst_131 = arith.constant 1.000000e+00 : f32
    %271 = vector.broadcast %cst_131 : f32 to vector<8x128xf32>
    %272 = arith.addf %270, %271 : vector<8x128xf32>
    %cst_132 = arith.constant 5.000000e-01 : f32
    %273 = vector.broadcast %cst_132 : f32 to vector<8x128xf32>
    %274 = arith.mulf %273, %272 : vector<8x128xf32>
    %275 = arith.select %81, %274, %270 : vector<8x128xi1>, vector<8x128xf32>
    %c96_i32_133 = arith.constant 96 : i32
    %276 = tpu.dynamic_rotate %275 by %c96_i32_133 dim 1 : vector<8x128xf32>, i32 -> vector<8x128xf32>
    %c64_i32_134 = arith.constant 64 : i32
    %277 = tpu.dynamic_rotate %275 by %c64_i32_134 dim 1 : vector<8x128xf32>, i32 -> vector<8x128xf32>
    %c32_i32_135 = arith.constant 32 : i32
    %278 = tpu.dynamic_rotate %275 by %c32_i32_135 dim 1 : vector<8x128xf32>, i32 -> vector<8x128xf32>
    %279 = arith.mulf %276, %230 : vector<8x128xf32>
    %280 = arith.mulf %275, %278 : vector<8x128xf32>
    %281 = arith.addf %279, %280 : vector<8x128xf32>
    %282 = math.tanh %281 : vector<8x128xf32>
    %283 = arith.mulf %277, %282 : vector<8x128xf32>
    %284 = arith.addf %233, %266 : vector<8x128xf32>
    %285 = arith.addf %234, %283 : vector<8x128xf32>
    %c4_i32 = arith.constant 4 : i32
    %286 = arith.index_cast %c4_i32 : i32 to index
    %c0_136 = arith.constant 0 : index
    %c0_137 = arith.constant 0 : index
    %287 = vector.load %arg9[%286, %c0_136, %c0_137] : memref<8x8x128xf32, #tpu.memory_space<vmem>>, vector<1x8x128xf32>
    %288 = vector.shape_cast %287 : vector<1x8x128xf32> to vector<8x128xf32>
    %c7_i32_138 = arith.constant 7 : i32
    %289 = arith.subi %c7_i32_138, %c4_i32 : i32
    %290 = arith.index_cast %289 : i32 to index
    %c0_139 = arith.constant 0 : index
    %c0_140 = arith.constant 0 : index
    %291 = vector.load %arg10[%290, %c0_139, %c0_140] : memref<8x8x128xf32, #tpu.memory_space<vmem>>, vector<1x8x128xf32>
    %292 = vector.shape_cast %291 : vector<1x8x128xf32> to vector<8x128xf32>
    %293 = arith.truncf %266 : vector<8x128xf32> to vector<8x128xbf16>
    %c0_141 = arith.constant 0 : index
    %c0_142 = arith.constant 0 : index
    %294 = vector.load %arg3[%c0_141, %c0_142] : memref<128x128xbf16, #tpu.memory_space<vmem>>, vector<128x128xbf16>
    %cst_143 = arith.constant dense<0.000000e+00> : vector<8x128xf32>
    %295 = tpu.matmul %293, %294, %cst_143 {dimension_numbers = #tpu.dot_dimension_numbers<[1], [0], [0], [1], [0, 0, 1, 1], [], []>} : vector<8x128xbf16>, vector<128x128xbf16>, vector<8x128xf32> -> vector<8x128xf32>
    %296 = arith.addf %288, %295 : vector<8x128xf32>
    %297 = arith.truncf %283 : vector<8x128xf32> to vector<8x128xbf16>
    %c0_144 = arith.constant 0 : index
    %c0_145 = arith.constant 0 : index
    %298 = vector.load %arg4[%c0_144, %c0_145] : memref<128x128xbf16, #tpu.memory_space<vmem>>, vector<128x128xbf16>
    %cst_146 = arith.constant dense<0.000000e+00> : vector<8x128xf32>
    %299 = tpu.matmul %297, %298, %cst_146 {dimension_numbers = #tpu.dot_dimension_numbers<[1], [0], [0], [1], [0, 0, 1, 1], [], []>} : vector<8x128xbf16>, vector<128x128xbf16>, vector<8x128xf32> -> vector<8x128xf32>
    %300 = arith.addf %292, %299 : vector<8x128xf32>
    %cst_147 = arith.constant 5.000000e-01 : f32
    %301 = vector.broadcast %cst_147 : f32 to vector<8x128xf32>
    %302 = arith.mulf %301, %296 : vector<8x128xf32>
    %303 = arith.select %81, %302, %296 : vector<8x128xi1>, vector<8x128xf32>
    %304 = math.tanh %303 : vector<8x128xf32>
    %cst_148 = arith.constant 1.000000e+00 : f32
    %305 = vector.broadcast %cst_148 : f32 to vector<8x128xf32>
    %306 = arith.addf %304, %305 : vector<8x128xf32>
    %cst_149 = arith.constant 5.000000e-01 : f32
    %307 = vector.broadcast %cst_149 : f32 to vector<8x128xf32>
    %308 = arith.mulf %307, %306 : vector<8x128xf32>
    %309 = arith.select %81, %308, %304 : vector<8x128xi1>, vector<8x128xf32>
    %c96_i32_150 = arith.constant 96 : i32
    %310 = tpu.dynamic_rotate %309 by %c96_i32_150 dim 1 : vector<8x128xf32>, i32 -> vector<8x128xf32>
    %c64_i32_151 = arith.constant 64 : i32
    %311 = tpu.dynamic_rotate %309 by %c64_i32_151 dim 1 : vector<8x128xf32>, i32 -> vector<8x128xf32>
    %c32_i32_152 = arith.constant 32 : i32
    %312 = tpu.dynamic_rotate %309 by %c32_i32_152 dim 1 : vector<8x128xf32>, i32 -> vector<8x128xf32>
    %313 = arith.mulf %310, %264 : vector<8x128xf32>
    %314 = arith.mulf %309, %312 : vector<8x128xf32>
    %315 = arith.addf %313, %314 : vector<8x128xf32>
    %316 = math.tanh %315 : vector<8x128xf32>
    %317 = arith.mulf %311, %316 : vector<8x128xf32>
    %cst_153 = arith.constant 5.000000e-01 : f32
    %318 = vector.broadcast %cst_153 : f32 to vector<8x128xf32>
    %319 = arith.mulf %318, %300 : vector<8x128xf32>
    %320 = arith.select %81, %319, %300 : vector<8x128xi1>, vector<8x128xf32>
    %321 = math.tanh %320 : vector<8x128xf32>
    %cst_154 = arith.constant 1.000000e+00 : f32
    %322 = vector.broadcast %cst_154 : f32 to vector<8x128xf32>
    %323 = arith.addf %321, %322 : vector<8x128xf32>
    %cst_155 = arith.constant 5.000000e-01 : f32
    %324 = vector.broadcast %cst_155 : f32 to vector<8x128xf32>
    %325 = arith.mulf %324, %323 : vector<8x128xf32>
    %326 = arith.select %81, %325, %321 : vector<8x128xi1>, vector<8x128xf32>
    %c96_i32_156 = arith.constant 96 : i32
    %327 = tpu.dynamic_rotate %326 by %c96_i32_156 dim 1 : vector<8x128xf32>, i32 -> vector<8x128xf32>
    %c64_i32_157 = arith.constant 64 : i32
    %328 = tpu.dynamic_rotate %326 by %c64_i32_157 dim 1 : vector<8x128xf32>, i32 -> vector<8x128xf32>
    %c32_i32_158 = arith.constant 32 : i32
    %329 = tpu.dynamic_rotate %326 by %c32_i32_158 dim 1 : vector<8x128xf32>, i32 -> vector<8x128xf32>
    %330 = arith.mulf %327, %281 : vector<8x128xf32>
    %331 = arith.mulf %326, %329 : vector<8x128xf32>
    %332 = arith.addf %330, %331 : vector<8x128xf32>
    %333 = math.tanh %332 : vector<8x128xf32>
    %334 = arith.mulf %328, %333 : vector<8x128xf32>
    %335 = arith.addf %284, %317 : vector<8x128xf32>
    %336 = arith.addf %285, %334 : vector<8x128xf32>
    %c5_i32 = arith.constant 5 : i32
    %337 = arith.index_cast %c5_i32 : i32 to index
    %c0_159 = arith.constant 0 : index
    %c0_160 = arith.constant 0 : index
    %338 = vector.load %arg9[%337, %c0_159, %c0_160] : memref<8x8x128xf32, #tpu.memory_space<vmem>>, vector<1x8x128xf32>
    %339 = vector.shape_cast %338 : vector<1x8x128xf32> to vector<8x128xf32>
    %c7_i32_161 = arith.constant 7 : i32
    %340 = arith.subi %c7_i32_161, %c5_i32 : i32
    %341 = arith.index_cast %340 : i32 to index
    %c0_162 = arith.constant 0 : index
    %c0_163 = arith.constant 0 : index
    %342 = vector.load %arg10[%341, %c0_162, %c0_163] : memref<8x8x128xf32, #tpu.memory_space<vmem>>, vector<1x8x128xf32>
    %343 = vector.shape_cast %342 : vector<1x8x128xf32> to vector<8x128xf32>
    %344 = arith.truncf %317 : vector<8x128xf32> to vector<8x128xbf16>
    %c0_164 = arith.constant 0 : index
    %c0_165 = arith.constant 0 : index
    %345 = vector.load %arg3[%c0_164, %c0_165] : memref<128x128xbf16, #tpu.memory_space<vmem>>, vector<128x128xbf16>
    %cst_166 = arith.constant dense<0.000000e+00> : vector<8x128xf32>
    %346 = tpu.matmul %344, %345, %cst_166 {dimension_numbers = #tpu.dot_dimension_numbers<[1], [0], [0], [1], [0, 0, 1, 1], [], []>} : vector<8x128xbf16>, vector<128x128xbf16>, vector<8x128xf32> -> vector<8x128xf32>
    %347 = arith.addf %339, %346 : vector<8x128xf32>
    %348 = arith.truncf %334 : vector<8x128xf32> to vector<8x128xbf16>
    %c0_167 = arith.constant 0 : index
    %c0_168 = arith.constant 0 : index
    %349 = vector.load %arg4[%c0_167, %c0_168] : memref<128x128xbf16, #tpu.memory_space<vmem>>, vector<128x128xbf16>
    %cst_169 = arith.constant dense<0.000000e+00> : vector<8x128xf32>
    %350 = tpu.matmul %348, %349, %cst_169 {dimension_numbers = #tpu.dot_dimension_numbers<[1], [0], [0], [1], [0, 0, 1, 1], [], []>} : vector<8x128xbf16>, vector<128x128xbf16>, vector<8x128xf32> -> vector<8x128xf32>
    %351 = arith.addf %343, %350 : vector<8x128xf32>
    %cst_170 = arith.constant 5.000000e-01 : f32
    %352 = vector.broadcast %cst_170 : f32 to vector<8x128xf32>
    %353 = arith.mulf %352, %347 : vector<8x128xf32>
    %354 = arith.select %81, %353, %347 : vector<8x128xi1>, vector<8x128xf32>
    %355 = math.tanh %354 : vector<8x128xf32>
    %cst_171 = arith.constant 1.000000e+00 : f32
    %356 = vector.broadcast %cst_171 : f32 to vector<8x128xf32>
    %357 = arith.addf %355, %356 : vector<8x128xf32>
    %cst_172 = arith.constant 5.000000e-01 : f32
    %358 = vector.broadcast %cst_172 : f32 to vector<8x128xf32>
    %359 = arith.mulf %358, %357 : vector<8x128xf32>
    %360 = arith.select %81, %359, %355 : vector<8x128xi1>, vector<8x128xf32>
    %c96_i32_173 = arith.constant 96 : i32
    %361 = tpu.dynamic_rotate %360 by %c96_i32_173 dim 1 : vector<8x128xf32>, i32 -> vector<8x128xf32>
    %c64_i32_174 = arith.constant 64 : i32
    %362 = tpu.dynamic_rotate %360 by %c64_i32_174 dim 1 : vector<8x128xf32>, i32 -> vector<8x128xf32>
    %c32_i32_175 = arith.constant 32 : i32
    %363 = tpu.dynamic_rotate %360 by %c32_i32_175 dim 1 : vector<8x128xf32>, i32 -> vector<8x128xf32>
    %364 = arith.mulf %361, %315 : vector<8x128xf32>
    %365 = arith.mulf %360, %363 : vector<8x128xf32>
    %366 = arith.addf %364, %365 : vector<8x128xf32>
    %367 = math.tanh %366 : vector<8x128xf32>
    %368 = arith.mulf %362, %367 : vector<8x128xf32>
    %cst_176 = arith.constant 5.000000e-01 : f32
    %369 = vector.broadcast %cst_176 : f32 to vector<8x128xf32>
    %370 = arith.mulf %369, %351 : vector<8x128xf32>
    %371 = arith.select %81, %370, %351 : vector<8x128xi1>, vector<8x128xf32>
    %372 = math.tanh %371 : vector<8x128xf32>
    %cst_177 = arith.constant 1.000000e+00 : f32
    %373 = vector.broadcast %cst_177 : f32 to vector<8x128xf32>
    %374 = arith.addf %372, %373 : vector<8x128xf32>
    %cst_178 = arith.constant 5.000000e-01 : f32
    %375 = vector.broadcast %cst_178 : f32 to vector<8x128xf32>
    %376 = arith.mulf %375, %374 : vector<8x128xf32>
    %377 = arith.select %81, %376, %372 : vector<8x128xi1>, vector<8x128xf32>
    %c96_i32_179 = arith.constant 96 : i32
    %378 = tpu.dynamic_rotate %377 by %c96_i32_179 dim 1 : vector<8x128xf32>, i32 -> vector<8x128xf32>
    %c64_i32_180 = arith.constant 64 : i32
    %379 = tpu.dynamic_rotate %377 by %c64_i32_180 dim 1 : vector<8x128xf32>, i32 -> vector<8x128xf32>
    %c32_i32_181 = arith.constant 32 : i32
    %380 = tpu.dynamic_rotate %377 by %c32_i32_181 dim 1 : vector<8x128xf32>, i32 -> vector<8x128xf32>
    %381 = arith.mulf %378, %332 : vector<8x128xf32>
    %382 = arith.mulf %377, %380 : vector<8x128xf32>
    %383 = arith.addf %381, %382 : vector<8x128xf32>
    %384 = math.tanh %383 : vector<8x128xf32>
    %385 = arith.mulf %379, %384 : vector<8x128xf32>
    %386 = arith.addf %335, %368 : vector<8x128xf32>
    %387 = arith.addf %336, %385 : vector<8x128xf32>
    %c6_i32 = arith.constant 6 : i32
    %388 = arith.index_cast %c6_i32 : i32 to index
    %c0_182 = arith.constant 0 : index
    %c0_183 = arith.constant 0 : index
    %389 = vector.load %arg9[%388, %c0_182, %c0_183] : memref<8x8x128xf32, #tpu.memory_space<vmem>>, vector<1x8x128xf32>
    %390 = vector.shape_cast %389 : vector<1x8x128xf32> to vector<8x128xf32>
    %c7_i32_184 = arith.constant 7 : i32
    %391 = arith.subi %c7_i32_184, %c6_i32 : i32
    %392 = arith.index_cast %391 : i32 to index
    %c0_185 = arith.constant 0 : index
    %c0_186 = arith.constant 0 : index
    %393 = vector.load %arg10[%392, %c0_185, %c0_186] : memref<8x8x128xf32, #tpu.memory_space<vmem>>, vector<1x8x128xf32>
    %394 = vector.shape_cast %393 : vector<1x8x128xf32> to vector<8x128xf32>
    %395 = arith.truncf %368 : vector<8x128xf32> to vector<8x128xbf16>
    %c0_187 = arith.constant 0 : index
    %c0_188 = arith.constant 0 : index
    %396 = vector.load %arg3[%c0_187, %c0_188] : memref<128x128xbf16, #tpu.memory_space<vmem>>, vector<128x128xbf16>
    %cst_189 = arith.constant dense<0.000000e+00> : vector<8x128xf32>
    %397 = tpu.matmul %395, %396, %cst_189 {dimension_numbers = #tpu.dot_dimension_numbers<[1], [0], [0], [1], [0, 0, 1, 1], [], []>} : vector<8x128xbf16>, vector<128x128xbf16>, vector<8x128xf32> -> vector<8x128xf32>
    %398 = arith.addf %390, %397 : vector<8x128xf32>
    %399 = arith.truncf %385 : vector<8x128xf32> to vector<8x128xbf16>
    %c0_190 = arith.constant 0 : index
    %c0_191 = arith.constant 0 : index
    %400 = vector.load %arg4[%c0_190, %c0_191] : memref<128x128xbf16, #tpu.memory_space<vmem>>, vector<128x128xbf16>
    %cst_192 = arith.constant dense<0.000000e+00> : vector<8x128xf32>
    %401 = tpu.matmul %399, %400, %cst_192 {dimension_numbers = #tpu.dot_dimension_numbers<[1], [0], [0], [1], [0, 0, 1, 1], [], []>} : vector<8x128xbf16>, vector<128x128xbf16>, vector<8x128xf32> -> vector<8x128xf32>
    %402 = arith.addf %394, %401 : vector<8x128xf32>
    %cst_193 = arith.constant 5.000000e-01 : f32
    %403 = vector.broadcast %cst_193 : f32 to vector<8x128xf32>
    %404 = arith.mulf %403, %398 : vector<8x128xf32>
    %405 = arith.select %81, %404, %398 : vector<8x128xi1>, vector<8x128xf32>
    %406 = math.tanh %405 : vector<8x128xf32>
    %cst_194 = arith.constant 1.000000e+00 : f32
    %407 = vector.broadcast %cst_194 : f32 to vector<8x128xf32>
    %408 = arith.addf %406, %407 : vector<8x128xf32>
    %cst_195 = arith.constant 5.000000e-01 : f32
    %409 = vector.broadcast %cst_195 : f32 to vector<8x128xf32>
    %410 = arith.mulf %409, %408 : vector<8x128xf32>
    %411 = arith.select %81, %410, %406 : vector<8x128xi1>, vector<8x128xf32>
    %c96_i32_196 = arith.constant 96 : i32
    %412 = tpu.dynamic_rotate %411 by %c96_i32_196 dim 1 : vector<8x128xf32>, i32 -> vector<8x128xf32>
    %c64_i32_197 = arith.constant 64 : i32
    %413 = tpu.dynamic_rotate %411 by %c64_i32_197 dim 1 : vector<8x128xf32>, i32 -> vector<8x128xf32>
    %c32_i32_198 = arith.constant 32 : i32
    %414 = tpu.dynamic_rotate %411 by %c32_i32_198 dim 1 : vector<8x128xf32>, i32 -> vector<8x128xf32>
    %415 = arith.mulf %412, %366 : vector<8x128xf32>
    %416 = arith.mulf %411, %414 : vector<8x128xf32>
    %417 = arith.addf %415, %416 : vector<8x128xf32>
    %418 = math.tanh %417 : vector<8x128xf32>
    %419 = arith.mulf %413, %418 : vector<8x128xf32>
    %cst_199 = arith.constant 5.000000e-01 : f32
    %420 = vector.broadcast %cst_199 : f32 to vector<8x128xf32>
    %421 = arith.mulf %420, %402 : vector<8x128xf32>
    %422 = arith.select %81, %421, %402 : vector<8x128xi1>, vector<8x128xf32>
    %423 = math.tanh %422 : vector<8x128xf32>
    %cst_200 = arith.constant 1.000000e+00 : f32
    %424 = vector.broadcast %cst_200 : f32 to vector<8x128xf32>
    %425 = arith.addf %423, %424 : vector<8x128xf32>
    %cst_201 = arith.constant 5.000000e-01 : f32
    %426 = vector.broadcast %cst_201 : f32 to vector<8x128xf32>
    %427 = arith.mulf %426, %425 : vector<8x128xf32>
    %428 = arith.select %81, %427, %423 : vector<8x128xi1>, vector<8x128xf32>
    %c96_i32_202 = arith.constant 96 : i32
    %429 = tpu.dynamic_rotate %428 by %c96_i32_202 dim 1 : vector<8x128xf32>, i32 -> vector<8x128xf32>
    %c64_i32_203 = arith.constant 64 : i32
    %430 = tpu.dynamic_rotate %428 by %c64_i32_203 dim 1 : vector<8x128xf32>, i32 -> vector<8x128xf32>
    %c32_i32_204 = arith.constant 32 : i32
    %431 = tpu.dynamic_rotate %428 by %c32_i32_204 dim 1 : vector<8x128xf32>, i32 -> vector<8x128xf32>
    %432 = arith.mulf %429, %383 : vector<8x128xf32>
    %433 = arith.mulf %428, %431 : vector<8x128xf32>
    %434 = arith.addf %432, %433 : vector<8x128xf32>
    %435 = math.tanh %434 : vector<8x128xf32>
    %436 = arith.mulf %430, %435 : vector<8x128xf32>
    %437 = arith.addf %386, %419 : vector<8x128xf32>
    %438 = arith.addf %387, %436 : vector<8x128xf32>
    %c7_i32_205 = arith.constant 7 : i32
    %439 = arith.index_cast %c7_i32_205 : i32 to index
    %c0_206 = arith.constant 0 : index
    %c0_207 = arith.constant 0 : index
    %440 = vector.load %arg9[%439, %c0_206, %c0_207] : memref<8x8x128xf32, #tpu.memory_space<vmem>>, vector<1x8x128xf32>
    %441 = vector.shape_cast %440 : vector<1x8x128xf32> to vector<8x128xf32>
    %c7_i32_208 = arith.constant 7 : i32
    %442 = arith.subi %c7_i32_208, %c7_i32_205 : i32
    %443 = arith.index_cast %442 : i32 to index
    %c0_209 = arith.constant 0 : index
    %c0_210 = arith.constant 0 : index
    %444 = vector.load %arg10[%443, %c0_209, %c0_210] : memref<8x8x128xf32, #tpu.memory_space<vmem>>, vector<1x8x128xf32>
    %445 = vector.shape_cast %444 : vector<1x8x128xf32> to vector<8x128xf32>
    %446 = arith.truncf %419 : vector<8x128xf32> to vector<8x128xbf16>
    %c0_211 = arith.constant 0 : index
    %c0_212 = arith.constant 0 : index
    %447 = vector.load %arg3[%c0_211, %c0_212] : memref<128x128xbf16, #tpu.memory_space<vmem>>, vector<128x128xbf16>
    %cst_213 = arith.constant dense<0.000000e+00> : vector<8x128xf32>
    %448 = tpu.matmul %446, %447, %cst_213 {dimension_numbers = #tpu.dot_dimension_numbers<[1], [0], [0], [1], [0, 0, 1, 1], [], []>} : vector<8x128xbf16>, vector<128x128xbf16>, vector<8x128xf32> -> vector<8x128xf32>
    %449 = arith.addf %441, %448 : vector<8x128xf32>
    %450 = arith.truncf %436 : vector<8x128xf32> to vector<8x128xbf16>
    %c0_214 = arith.constant 0 : index
    %c0_215 = arith.constant 0 : index
    %451 = vector.load %arg4[%c0_214, %c0_215] : memref<128x128xbf16, #tpu.memory_space<vmem>>, vector<128x128xbf16>
    %cst_216 = arith.constant dense<0.000000e+00> : vector<8x128xf32>
    %452 = tpu.matmul %450, %451, %cst_216 {dimension_numbers = #tpu.dot_dimension_numbers<[1], [0], [0], [1], [0, 0, 1, 1], [], []>} : vector<8x128xbf16>, vector<128x128xbf16>, vector<8x128xf32> -> vector<8x128xf32>
    %453 = arith.addf %445, %452 : vector<8x128xf32>
    %cst_217 = arith.constant 5.000000e-01 : f32
    %454 = vector.broadcast %cst_217 : f32 to vector<8x128xf32>
    %455 = arith.mulf %454, %449 : vector<8x128xf32>
    %456 = arith.select %81, %455, %449 : vector<8x128xi1>, vector<8x128xf32>
    %457 = math.tanh %456 : vector<8x128xf32>
    %cst_218 = arith.constant 1.000000e+00 : f32
    %458 = vector.broadcast %cst_218 : f32 to vector<8x128xf32>
    %459 = arith.addf %457, %458 : vector<8x128xf32>
    %cst_219 = arith.constant 5.000000e-01 : f32
    %460 = vector.broadcast %cst_219 : f32 to vector<8x128xf32>
    %461 = arith.mulf %460, %459 : vector<8x128xf32>
    %462 = arith.select %81, %461, %457 : vector<8x128xi1>, vector<8x128xf32>
    %c96_i32_220 = arith.constant 96 : i32
    %463 = tpu.dynamic_rotate %462 by %c96_i32_220 dim 1 : vector<8x128xf32>, i32 -> vector<8x128xf32>
    %c64_i32_221 = arith.constant 64 : i32
    %464 = tpu.dynamic_rotate %462 by %c64_i32_221 dim 1 : vector<8x128xf32>, i32 -> vector<8x128xf32>
    %c32_i32_222 = arith.constant 32 : i32
    %465 = tpu.dynamic_rotate %462 by %c32_i32_222 dim 1 : vector<8x128xf32>, i32 -> vector<8x128xf32>
    %466 = arith.mulf %463, %417 : vector<8x128xf32>
    %467 = arith.mulf %462, %465 : vector<8x128xf32>
    %468 = arith.addf %466, %467 : vector<8x128xf32>
    %469 = math.tanh %468 : vector<8x128xf32>
    %470 = arith.mulf %464, %469 : vector<8x128xf32>
    %cst_223 = arith.constant 5.000000e-01 : f32
    %471 = vector.broadcast %cst_223 : f32 to vector<8x128xf32>
    %472 = arith.mulf %471, %453 : vector<8x128xf32>
    %473 = arith.select %81, %472, %453 : vector<8x128xi1>, vector<8x128xf32>
    %474 = math.tanh %473 : vector<8x128xf32>
    %cst_224 = arith.constant 1.000000e+00 : f32
    %475 = vector.broadcast %cst_224 : f32 to vector<8x128xf32>
    %476 = arith.addf %474, %475 : vector<8x128xf32>
    %cst_225 = arith.constant 5.000000e-01 : f32
    %477 = vector.broadcast %cst_225 : f32 to vector<8x128xf32>
    %478 = arith.mulf %477, %476 : vector<8x128xf32>
    %479 = arith.select %81, %478, %474 : vector<8x128xi1>, vector<8x128xf32>
    %c96_i32_226 = arith.constant 96 : i32
    %480 = tpu.dynamic_rotate %479 by %c96_i32_226 dim 1 : vector<8x128xf32>, i32 -> vector<8x128xf32>
    %c64_i32_227 = arith.constant 64 : i32
    %481 = tpu.dynamic_rotate %479 by %c64_i32_227 dim 1 : vector<8x128xf32>, i32 -> vector<8x128xf32>
    %c32_i32_228 = arith.constant 32 : i32
    %482 = tpu.dynamic_rotate %479 by %c32_i32_228 dim 1 : vector<8x128xf32>, i32 -> vector<8x128xf32>
    %483 = arith.mulf %480, %434 : vector<8x128xf32>
    %484 = arith.mulf %479, %482 : vector<8x128xf32>
    %485 = arith.addf %483, %484 : vector<8x128xf32>
    %486 = math.tanh %485 : vector<8x128xf32>
    %487 = arith.mulf %481, %486 : vector<8x128xf32>
    %488 = arith.addf %437, %470 : vector<8x128xf32>
    %489 = arith.addf %438, %487 : vector<8x128xf32>
    %c8_i32 = arith.constant 8 : i32
    %c0_229 = arith.constant 0 : index
    %c0_230 = arith.constant 0 : index
    %490 = vector.load %arg5[%c0_229, %c0_230] : memref<1x128xf32, #tpu.memory_space<vmem>>, vector<1x128xf32>
    %491 = vector.broadcast %490 : vector<1x128xf32> to vector<8x128xf32>
    %492 = arith.mulf %488, %491 : vector<8x128xf32>
    %c0_231 = arith.constant 0 : index
    %c0_232 = arith.constant 0 : index
    %493 = vector.load %arg6[%c0_231, %c0_232] : memref<1x128xf32, #tpu.memory_space<vmem>>, vector<1x128xf32>
    %494 = vector.broadcast %493 : vector<1x128xf32> to vector<8x128xf32>
    %495 = arith.mulf %489, %494 : vector<8x128xf32>
    %496 = arith.addf %492, %495 : vector<8x128xf32>
    %cst_233 = arith.constant dense<0.000000e+00> : vector<8xf32>
    %497 = vector.multi_reduction <add>, %496, %cst_233 [1] : vector<8x128xf32> to vector<8xf32>
    %498 = vector.shape_cast %497 : vector<8xf32> to vector<8x1xf32>
    %cst_234 = arith.constant 1.250000e-01 : f32
    %499 = vector.broadcast %cst_234 : f32 to vector<8x1xf32>
    %500 = arith.mulf %498, %499 : vector<8x1xf32>
    %c0_235 = arith.constant 0 : index
    %c0_236 = arith.constant 0 : index
    %501 = vector.load %arg7[%c0_235, %c0_236] : memref<1x1xf32, #tpu.memory_space<vmem>>, vector<1x1xf32>
    %502 = vector.broadcast %501 : vector<1x1xf32> to vector<8x1xf32>
    %503 = arith.addf %500, %502 : vector<8x1xf32>
    %504 = vector.shape_cast %503 : vector<8x1xf32> to vector<8x1xf32>
    %505 = vector.broadcast %504 : vector<8x1xf32> to vector<8x128xf32>
    %c0_237 = arith.constant 0 : index
    %c0_238 = arith.constant 0 : index
    %506 = vector.load %arg8[%c0_237, %c0_238] : memref<8x128xf32, #tpu.memory_space<vmem>>, vector<8x128xf32>
    tpu.vector_store %arg8[%c0_237, %c0_238], %505 {strides = array<i32>} : memref<8x128xf32, #tpu.memory_space<vmem>>, vector<8x128xf32>,
    return
  }
}

</mosaic_0001>

<llo_original>
// kernel: bilstm_forward.1
$region0: #{bilstm_forward.1}
  #allocation0 [shape = 'u32[]', space=smem, size = 0x4, offset = 0x4, fixed_abs, tag = 'smem constant byte address 0x4 - core index']
  #allocation1 [shape = 'u32[144,128]{1,0:T(1,128)}', space=vmem, size = 0x12000, scoped, tag = 'internal scratch']
  #allocation2 [shape = 'f32[8,8,128]{2,1,0:T(8,128)}', space=vmem, size = 0x8000, scoped, tag = 'scratch operand']
  #allocation3 [shape = 'f32[8,8,128]{2,1,0:T(8,128)}', space=vmem, size = 0x8000, scoped, tag = 'scratch operand']
  #allocation4 [shape = 'f32[1,1]{1,0:T(1,128)S(1)}', space=vmem, size = 0x200, scoped, tag = 'scoped memory for bilstm_forward.1']
  %s0 = inlined_call_operand.vmem [shape: bf16[64,200], index: 0, kind: input, shape index: {}]
  %s1 = inlined_call_operand.vmem [shape: bf16[200,256], index: 1, kind: input, shape index: {}]
  %s2 = inlined_call_operand.vmem [shape: f32[1,256], index: 2, kind: input, shape index: {}]
  %s3 = inlined_call_operand.vmem [shape: bf16[128,128], index: 3, kind: input, shape index: {}]
  %s4 = inlined_call_operand.hbm [shape: bf16[128,128], index: 4, kind: input, shape index: {}]
  %s5 = inlined_call_operand.vmem [shape: f32[1,128], index: 5, kind: input, shape index: {}]
  %s6 = inlined_call_operand.vmem [shape: f32[1,128], index: 6, kind: input, shape index: {}]
  %s7 = inlined_call_operand.<no memory space> [shape: f32[1,1], index: 7, kind: input, shape index: {}]
  %s8 = inlined_call_operand.vmem [shape: f32[8,128], index: 8, kind: output, shape index: {}]
  %s9 = sld [smem:[#allocation0]]
  $region46: #{bilstm_forward.1} parent=0
    _
  %s11 = ssub.s32 1, %s9
  %s12 = scalar_select 0, %s11, %s9
  %v13 = vstv %s7
  %14 = vst [vmem:[#allocation4] sm:$0x1] %v13
  $region1: #{bilstm_forward.1} parent=0
    #allocation5 [shape = 'u8[32768]{0}', space=vmem, size = 0x8000, scoped, tag = 'input window, operand 4, single buffered']
    #allocation6 [shape = 's32[1]{0}', space=sflag, size = 0x4, scoped, tag = 'scoped memory for bilstm_forward.1']
    %15 = vsyncpa [#allocation6], 0
    // Predicated region
    $region2: #{bilstm_forward.1} parent=1 // pred_check
      _
    $region3: #{bilstm_forward.1} parent=1 // pred_check_branch
      %17 = sbr.rel (0) target = $region5
    $region4: #{bilstm_forward.1} parent=1 // pred_region
      _
    $region5: #{bilstm_forward.1} parent=1 // pred_fallthru
      _
    // Predicated region
    $region6: #{bilstm_forward.1} parent=1 // pred_check
      _
    $region7: #{bilstm_forward.1} parent=1 // pred_check_branch
      %19 = sbr.rel (0) target = $region9
    $region8: #{bilstm_forward.1} parent=1 // pred_region
      _
    $region9: #{bilstm_forward.1} parent=1 // pred_fallthru
      _
    // Predicated region
    $region10: #{bilstm_forward.1} parent=1 // pred_check
      _
    $region11: #{bilstm_forward.1} parent=1 // pred_check_branch
      %21 = sbr.rel (0) target = $region13
    $region12: #{bilstm_forward.1} parent=1 // pred_region
      _
    $region13: #{bilstm_forward.1} parent=1 // pred_fallthru
      _
    // Predicated region
    $region14: #{bilstm_forward.1} parent=1 // pred_check
      _
    $region15: #{bilstm_forward.1} parent=1 // pred_check_branch
      %23 = sbr.rel (0) target = $region17
    $region16: #{bilstm_forward.1} parent=1 // pred_region
      _
    $region17: #{bilstm_forward.1} parent=1 // pred_fallthru
      _
    // Predicated region
    $region18: #{bilstm_forward.1} parent=1 // pred_check
      _
    $region19: #{bilstm_forward.1} parent=1 // pred_check_branch
      %25 = sbr.rel (0) target = $region21
    $region20: #{bilstm_forward.1} parent=1 // pred_region
      %s27 = ssub.s32 1024, 1024
      %28 = vsyncadd [#allocation6], %s27
      %s29 = sshll.u32 [#allocation5], 4
      %s30 = int_to_ptr.vmem [resolvable:$true] %s29
      %35 = dma.hbm_to_vmem [thread:$0]  %s4, 1024, %s30, [#allocation6], 64, 64, 4
    $region21: #{bilstm_forward.1} parent=1 // pred_fallthru
      _
    // Predicated region
    $region22: #{bilstm_forward.1} parent=1 // pred_check
      _
    $region23: #{bilstm_forward.1} parent=1 // pred_check_branch
      %37 = sbr.rel (0) target = $region25
    $region24: #{bilstm_forward.1} parent=1 // pred_region
      _
    $region25: #{bilstm_forward.1} parent=1 // pred_fallthru
      _
    // Predicated region
    $region26: #{bilstm_forward.1} parent=1 // pred_check
      _
    $region27: #{bilstm_forward.1} parent=1 // pred_check_branch
      %39 = sbr.rel (0) target = $region29
    $region28: #{bilstm_forward.1} parent=1 // pred_region
      _
    $region29: #{bilstm_forward.1} parent=1 // pred_fallthru
      _
    // Predicated region
    $region30: #{bilstm_forward.1} parent=1 // pred_check
      _
    $region31: #{bilstm_forward.1} parent=1 // pred_check_branch
      %41 = sbr.rel (0) target = $region33
    $region32: #{bilstm_forward.1} parent=1 // pred_region
      _
    $region33: #{bilstm_forward.1} parent=1 // pred_fallthru
      _
    // Predicated region
    $region34: #{bilstm_forward.1} parent=1 // pred_check
      _
    $region35: #{bilstm_forward.1} parent=1 // pred_check_branch
      %43 = sbr.rel (0) target = $region37
    $region36: #{bilstm_forward.1} parent=1 // pred_region
      %44 = dma.done [#allocation6], 1024
    $region37: #{bilstm_forward.1} parent=1 // pred_fallthru
      _
    %v46 = vld [vmem:[%s0] sm:$0xff]
    %v47 = vld [vmem:[%s0 + $0x8] sm:$0xff]
    %v48 = vld [vmem:[%s0 + $0x10] sm:$0xff]
    %v49 = vld [vmem:[%s0 + $0x18] sm:$0xff]
    %v50 = vld [vmem:[%s0 + $0x20] sm:$0xff]
    %v51 = vld [vmem:[%s0 + $0x28] sm:$0xff]
    %v52 = vld [vmem:[%s0 + $0x30] sm:$0xff]
    %v53 = vld [vmem:[%s0 + $0x38] sm:$0xff]
    %v54 = vld [vmem:[%s1] sm:$0xff]
    %v55 = vld [vmem:[%s1 + $0x8] sm:$0xff]
    %v56 = vld [vmem:[%s1 + $0x10] sm:$0xff]
    %v57 = vld [vmem:[%s1 + $0x18] sm:$0xff]
    %v58 = vld [vmem:[%s1 + $0x20] sm:$0xff]
    %v59 = vld [vmem:[%s1 + $0x28] sm:$0xff]
    %v60 = vld [vmem:[%s1 + $0x30] sm:$0xff]
    %v61 = vld [vmem:[%s1 + $0x38] sm:$0xff]
    %v62 = vld [vmem:[%s1 + $0x40] sm:$0xff]
    %v63 = vld [vmem:[%s1 + $0x48] sm:$0xff]
    %v64 = vld [vmem:[%s1 + $0x50] sm:$0xff]
    %v65 = vld [vmem:[%s1 + $0x58] sm:$0xff]
    %v66 = vld [vmem:[%s1 + $0x60] sm:$0xff]
    %v67 = vld [vmem:[%s1 + $0x68] sm:$0xff]
    %v68 = vld [vmem:[%s1 + $0x70] sm:$0xff]
    %v69 = vld [vmem:[%s1 + $0x78] sm:$0xff]
    %v70 = vld [vmem:[%s1 + $0x80] sm:$0xff]
    %v71 = vld [vmem:[%s1 + $0x88] sm:$0xff]
    %v72 = vld [vmem:[%s1 + $0x90] sm:$0xff]
    %v73 = vld [vmem:[%s1 + $0x98] sm:$0xff]
    %v74 = vld [vmem:[%s1 + $0xa0] sm:$0xff]
    %v75 = vld [vmem:[%s1 + $0xa8] sm:$0xff]
    %v76 = vld [vmem:[%s1 + $0xb0] sm:$0xff]
    %v77 = vld [vmem:[%s1 + $0xb8] sm:$0xff]
    %v78 = vld [vmem:[%s1 + $0xc0] sm:$0xff]
    %v79 = vld [vmem:[%s2] sm:$0x3]
    %v81 = vlaneseq
    %v82 = vshrl.u32 %v81, 7
    %v83 = vsub.s32 0, %v82
    %v84 = vrot.slane %v79, %v83
    %v85 = vlaneseq
    %v86 = vshrl.u32 %v85, 7
    %v87 = vsub.s32 1, %v86
    %v88 = vrot.slane %v79, %v87
    %v99 = vunpack.c.l.b16 %v46
    %v100 = vunpack.c.h.b16 %v46
    %v101 = vunpack.c.l.b16 %v47
    %v102 = vunpack.c.h.b16 %v47
    %v103 = vunpack.c.l.b16 %v48
    %v104 = vunpack.c.h.b16 %v48
    %v105 = vunpack.c.l.b16 %v49
    %v106 = vunpack.c.h.b16 %v49
    %v107 = vunpack.c.l.b16 %v50
    %v108 = vunpack.c.h.b16 %v50
    %v109 = vunpack.c.l.b16 %v51
    %v110 = vunpack.c.h.b16 %v51
    %v111 = vunpack.c.l.b16 %v52
    %v112 = vunpack.c.h.b16 %v52
    %v113 = vunpack.c.l.b16 %v53
    %v114 = vunpack.c.h.b16 %v53
    %v115 = vpack.c.b16 %v101, %v99
    %v116 = vpack.c.b16 %v102, %v100
    %v117 = vpack.c.b16 %v105, %v103
    %v118 = vpack.c.b16 %v106, %v104
    %v119 = vpack.c.b16 %v109, %v107
    %v120 = vpack.c.b16 %v110, %v108
    %v121 = vpack.c.b16 %v113, %v111
    %v122 = vpack.c.b16 %v114, %v112
    %v152 = vunpack.c.l.b16 %v54
    %v153 = vunpack.c.h.b16 %v54
    %v154 = vunpack.c.l.b16 %v55
    %v155 = vunpack.c.h.b16 %v55
    %v156 = vunpack.c.l.b16 %v56
    %v157 = vunpack.c.h.b16 %v56
    %v158 = vunpack.c.l.b16 %v57
    %v159 = vunpack.c.h.b16 %v57
    %v160 = vunpack.c.l.b16 %v58
    %v161 = vunpack.c.h.b16 %v58
    %v162 = vunpack.c.l.b16 %v59
    %v163 = vunpack.c.h.b16 %v59
    %v164 = vunpack.c.l.b16 %v60
    %v165 = vunpack.c.h.b16 %v60
    %v166 = vunpack.c.l.b16 %v61
    %v167 = vunpack.c.h.b16 %v61
    %v168 = vunpack.c.l.b16 %v62
    %v169 = vunpack.c.h.b16 %v62
    %v170 = vunpack.c.l.b16 %v63
    %v171 = vunpack.c.h.b16 %v63
    %v172 = vunpack.c.l.b16 %v64
    %v173 = vunpack.c.h.b16 %v64
    %v174 = vunpack.c.l.b16 %v65
    %v175 = vunpack.c.h.b16 %v65
    %v176 = vunpack.c.l.b16 %v66
    %v177 = vunpack.c.h.b16 %v66
    %v178 = vunpack.c.l.b16 %v67
    %v179 = vunpack.c.h.b16 %v67
    %v180 = vunpack.c.l.b16 %v68
    %v181 = vunpack.c.h.b16 %v68
    %v182 = vunpack.c.l.b16 %v69
    %v183 = vunpack.c.h.b16 %v69
    %v184 = vunpack.c.l.b16 %v70
    %v185 = vunpack.c.h.b16 %v70
    %v186 = vunpack.c.l.b16 %v71
    %v187 = vunpack.c.h.b16 %v71
    %v188 = vunpack.c.l.b16 %v72
    %v189 = vunpack.c.h.b16 %v72
    %v190 = vunpack.c.l.b16 %v73
    %v191 = vunpack.c.h.b16 %v73
    %v192 = vunpack.c.l.b16 %v74
    %v193 = vunpack.c.h.b16 %v74
    %v194 = vunpack.c.l.b16 %v75
    %v195 = vunpack.c.h.b16 %v75
    %v196 = vunpack.c.l.b16 %v76
    %v197 = vunpack.c.h.b16 %v76
    %v198 = vunpack.c.l.b16 %v77
    %v199 = vunpack.c.h.b16 %v77
    %v200 = vunpack.c.l.b16 %v78
    %v201 = vunpack.c.h.b16 %v78
    %v202 = vpack.c.b16 %v154, %v152
    %v203 = vpack.c.b16 %v155, %v153
    %v204 = vpack.c.b16 %v158, %v156
    %v205 = vpack.c.b16 %v159, %v157
    %v206 = vpack.c.b16 %v162, %v160
    %v207 = vpack.c.b16 %v163, %v161
    %v208 = vpack.c.b16 %v166, %v164
    %v209 = vpack.c.b16 %v167, %v165
    %v210 = vpack.c.b16 %v170, %v168
    %v211 = vpack.c.b16 %v171, %v169
    %v212 = vpack.c.b16 %v174, %v172
    %v213 = vpack.c.b16 %v175, %v173
    %v214 = vpack.c.b16 %v178, %v176
    %v215 = vpack.c.b16 %v179, %v177
    %v216 = vpack.c.b16 %v182, %v180
    %v217 = vpack.c.b16 %v183, %v181
    %v218 = vpack.c.b16 %v186, %v184
    %v219 = vpack.c.b16 %v187, %v185
    %v220 = vpack.c.b16 %v190, %v188
    %v221 = vpack.c.b16 %v191, %v189
    %v222 = vpack.c.b16 %v194, %v192
    %v223 = vpack.c.b16 %v195, %v193
    %v224 = vpack.c.b16 %v198, %v196
    %v225 = vpack.c.b16 %v199, %v197
    %v226 = vpack.c.b16 %v200, %v200
    %v227 = vpack.c.b16 %v201, %v201
    %vm252 = vcmask 588800
    %v254 = vsel %vm252, %v116, 0
    %v257 = vsel %vm252, %v118, 0
    %v260 = vsel %vm252, %v120, 0
    %v263 = vsel %vm252, %v122, 0
    %vm265 = vcmask 1043456
    %v267 = vsel %vm265, %v226, 0
    %v270 = vsel %vm265, %v227, 0
    %272 = vmatprep.subr.bf16.mxu0 %v203
    %273 = vmatpush1.bf16.msra.mxu0 %v202
    %274 = vmatprep.subr.bf16.mxu0 %v205
    %275 = vmatpush1.bf16.msra.mxu0 %v204
    %276 = vmatprep.subr.bf16.mxu0 %v207
    %277 = vmatpush1.bf16.msra.mxu0 %v206
    %278 = vmatprep.subr.bf16.mxu0 %v209
    %279 = vmatpush1.bf16.msra.mxu0 %v208
    %280 = vmatprep.subr.bf16.mxu0 %v211
    %281 = vmatpush1.bf16.msra.mxu0 %v210
    %282 = vmatprep.subr.bf16.mxu0 %v213
    %283 = vmatpush1.bf16.msra.mxu0 %v212
    %284 = vmatprep.subr.bf16.mxu0 %v215
    %285 = vmatpush1.bf16.msra.mxu0 %v214
    %286 = vmatprep.subr.bf16.mxu0 %v217
    %287 = vmatpush1.bf16.msra.mxu0 %v216
    %288 = vmatprep.subr.bf16.mxu0 %v219
    %289 = vmatpush1.bf16.msra.mxu0 %v218
    %290 = vmatprep.subr.bf16.mxu0 %v221
    %291 = vmatpush1.bf16.msra.mxu0 %v220
    %292 = vmatprep.subr.bf16.mxu0 %v223
    %293 = vmatpush1.bf16.msra.mxu0 %v222
    %294 = vmatprep.subr.bf16.mxu0 %v225
    %295 = vmatpush1.bf16.msra.mxu0 %v224
    %296 = vmatprep.subr.bf16.mxu0 %v270
    %297 = vmatpush1.bf16.msra.mxu0 %v267
    %298 = vmatprep.subr.bf16.mxu0 0
    %299 = vmatpush1.bf16.msra.mxu0 0
    %300 = vmatprep.subr.bf16.mxu0 0
    %301 = vmatpush1.bf16.msra.mxu0 0
    %302 = vmatprep.subr.bf16.mxu0 0
    %303 = vmatpush1.bf16.msra.mxu0 0
    %304 = vmatprep.mubr.bf16.mxu0 %v254
    %305 = vmatmul.mubr.bf16.gmra.mrb[0].mxu0 %v115
    %v306 = vpop.f32.mrb[0].mxu0
    %v307 = vadd.f32 %v84, %v306
    %v308 = vpop.f32.mrb[0].mxu0
    %v309 = vadd.f32 %v88, %v308
    %v310 = vpop.f32.mrb[0].mxu0
    %v311 = vadd.f32 %v84, %v310
    %v312 = vpop.f32.mrb[0].mxu0
    %v313 = vadd.f32 %v88, %v312
    %314 = vmatprep.mubr.bf16.mxu0 %v257
    %315 = vmatmul.mubr.bf16.gmra.mrb[0].mxu0 %v117
    %v316 = vpop.f32.mrb[0].mxu0
    %v317 = vadd.f32 %v84, %v316
    %v318 = vpop.f32.mrb[0].mxu0
    %v319 = vadd.f32 %v88, %v318
    %v320 = vpop.f32.mrb[0].mxu0
    %v321 = vadd.f32 %v84, %v320
    %v322 = vpop.f32.mrb[0].mxu0
    %v323 = vadd.f32 %v88, %v322
    %324 = vmatprep.mubr.bf16.mxu0 %v260
    %325 = vmatmul.mubr.bf16.gmra.mrb[0].mxu0 %v119
    %v326 = vpop.f32.mrb[0].mxu0
    %v327 = vadd.f32 %v84, %v326
    %v328 = vpop.f32.mrb[0].mxu0
    %v329 = vadd.f32 %v88, %v328
    %v330 = vpop.f32.mrb[0].mxu0
    %v331 = vadd.f32 %v84, %v330
    %v332 = vpop.f32.mrb[0].mxu0
    %v333 = vadd.f32 %v88, %v332
    %334 = vmatprep.mubr.bf16.mxu0 %v263
    %335 = vmatmul.mubr.bf16.gmra.mrb[0].mxu0 %v121
    %v336 = vpop.f32.mrb[0].mxu0
    %v337 = vadd.f32 %v84, %v336
    %v338 = vpop.f32.mrb[0].mxu0
    %v339 = vadd.f32 %v88, %v338
    %v340 = vpop.f32.mrb[0].mxu0
    %v341 = vadd.f32 %v84, %v340
    %v342 = vpop.f32.mrb[0].mxu0
    %v343 = vadd.f32 %v88, %v342
    %344 = vdwg.mxu0
    %345 = vst [vmem:[#allocation2] sm:$0xff] %v307
    %346 = vst [vmem:[#allocation3] sm:$0xff] %v309
    %s347 = scalar_lea.vmem [#allocation2], 8
    %348 = vst [vmem:[%s347] sm:$0xff] %v311
    %s349 = scalar_lea.vmem [#allocation3], 8
    %350 = vst [vmem:[%s349] sm:$0xff] %v313
    %s351 = scalar_lea.vmem [#allocation2], 16
    %352 = vst [vmem:[%s351] sm:$0xff] %v317
    %s353 = scalar_lea.vmem [#allocation3], 16
    %354 = vst [vmem:[%s353] sm:$0xff] %v319
    %s355 = scalar_lea.vmem [#allocation2], 24
    %356 = vst [vmem:[%s355] sm:$0xff] %v321
    %s357 = scalar_lea.vmem [#allocation3], 24
    %358 = vst [vmem:[%s357] sm:$0xff] %v323
    %s359 = scalar_lea.vmem [#allocation2], 32
    %360 = vst [vmem:[%s359] sm:$0xff] %v327
    %s361 = scalar_lea.vmem [#allocation3], 32
    %362 = vst [vmem:[%s361] sm:$0xff] %v329
    %s363 = scalar_lea.vmem [#allocation2], 40
    %364 = vst [vmem:[%s363] sm:$0xff] %v331
    %s365 = scalar_lea.vmem [#allocation3], 40
    %366 = vst [vmem:[%s365] sm:$0xff] %v333
    %s367 = scalar_lea.vmem [#allocation2], 48
    %368 = vst [vmem:[%s367] sm:$0xff] %v337
    %s369 = scalar_lea.vmem [#allocation3], 48
    %370 = vst [vmem:[%s369] sm:$0xff] %v339
    %s371 = scalar_lea.vmem [#allocation2], 56
    %372 = vst [vmem:[%s371] sm:$0xff] %v341
    %s373 = scalar_lea.vmem [#allocation3], 56
    %374 = vst [vmem:[%s373] sm:$0xff] %v343
    %v375 = vlaneseq
    %v376 = vand.u32 %v375, 127
    %vm377 = vcmp.lt.s32.totalorder %v376, 96
    %v378 = vld [vmem:[#allocation2] sm:$0xff]
    %v379 = vld [vmem:[%s373] sm:$0xff]
    %v380 = vld [vmem:[%s3] sm:$0xf]
    %v381 = vld [vmem:[%s3 + $0x4] sm:$0xf]
    %v382 = vld [vmem:[%s3 + $0x8] sm:$0xf]
    %v383 = vld [vmem:[%s3 + $0xc] sm:$0xf]
    %v384 = vld [vmem:[%s3 + $0x10] sm:$0xf]
    %v385 = vld [vmem:[%s3 + $0x14] sm:$0xf]
    %v386 = vld [vmem:[%s3 + $0x18] sm:$0xf]
    %v387 = vld [vmem:[%s3 + $0x1c] sm:$0xf]
    %v388 = vld [vmem:[%s3 + $0x20] sm:$0xf]
    %v389 = vld [vmem:[%s3 + $0x24] sm:$0xf]
    %v390 = vld [vmem:[%s3 + $0x28] sm:$0xf]
    %v391 = vld [vmem:[%s3 + $0x2c] sm:$0xf]
    %v392 = vld [vmem:[%s3 + $0x30] sm:$0xf]
    %v393 = vld [vmem:[%s3 + $0x34] sm:$0xf]
    %v394 = vld [vmem:[%s3 + $0x38] sm:$0xf]
    %v395 = vld [vmem:[%s3 + $0x3c] sm:$0xf]
    %v412 = vunpack.c.l.b16 %v380
    %v413 = vunpack.c.l.b16 %v381
    %v414 = vunpack.c.l.b16 %v382
    %v415 = vunpack.c.l.b16 %v383
    %v416 = vunpack.c.l.b16 %v384
    %v417 = vunpack.c.l.b16 %v385
    %v418 = vunpack.c.l.b16 %v386
    %v419 = vunpack.c.l.b16 %v387
    %v420 = vunpack.c.l.b16 %v388
    %v421 = vunpack.c.l.b16 %v389
    %v422 = vunpack.c.l.b16 %v390
    %v423 = vunpack.c.l.b16 %v391
    %v424 = vunpack.c.l.b16 %v392
    %v425 = vunpack.c.l.b16 %v393
    %v426 = vunpack.c.l.b16 %v394
    %v427 = vunpack.c.l.b16 %v395
    %v428 = vpack.c.b16 %v413, %v412
    %v429 = vpack.c.b16 %v415, %v414
    %v430 = vpack.c.b16 %v417, %v416
    %v431 = vpack.c.b16 %v419, %v418
    %v432 = vpack.c.b16 %v421, %v420
    %v433 = vpack.c.b16 %v423, %v422
    %v434 = vpack.c.b16 %v425, %v424
    %v435 = vpack.c.b16 %v427, %v426
    %444 = vmatprep.subr.bf16.mxu0 0
    %445 = vmatpush1.bf16.msra.mxu0 %v428
    %446 = vmatprep.subr.bf16.mxu0 0
    %447 = vmatpush1.bf16.msra.mxu0 %v429
    %448 = vmatprep.subr.bf16.mxu0 0
    %449 = vmatpush1.bf16.msra.mxu0 %v430
    %450 = vmatprep.subr.bf16.mxu0 0
    %451 = vmatpush1.bf16.msra.mxu0 %v431
    %452 = vmatprep.subr.bf16.mxu0 0
    %453 = vmatpush1.bf16.msra.mxu0 %v432
    %454 = vmatprep.subr.bf16.mxu0 0
    %455 = vmatpush1.bf16.msra.mxu0 %v433
    %456 = vmatprep.subr.bf16.mxu0 0
    %457 = vmatpush1.bf16.msra.mxu0 %v434
    %458 = vmatprep.subr.bf16.mxu0 0
    %459 = vmatpush1.bf16.msra.mxu0 %v435
    %460 = vmatprep.subr.bf16.mxu0 0
    %461 = vmatpush1.bf16.msra.mxu0 0
    %462 = vmatprep.subr.bf16.mxu0 0
    %463 = vmatpush1.bf16.msra.mxu0 0
    %464 = vmatprep.subr.bf16.mxu0 0
    %465 = vmatpush1.bf16.msra.mxu0 0
    %466 = vmatprep.subr.bf16.mxu0 0
    %467 = vmatpush1.bf16.msra.mxu0 0
    %468 = vmatprep.subr.bf16.mxu0 0
    %469 = vmatpush1.bf16.msra.mxu0 0
    %470 = vmatprep.subr.bf16.mxu0 0
    %471 = vmatpush1.bf16.msra.mxu0 0
    %472 = vmatprep.subr.bf16.mxu0 0
    %473 = vmatpush1.bf16.msra.mxu0 0
    %474 = vmatprep.subr.bf16.mxu0 0
    %475 = vmatpush1.bf16.msra.mxu0 0
    %476 = vmatprep.mubr.bf16.mxu0 0
    %477 = vmatmul.mubr.bf16.gmra.mrb[0].mxu0 0
    %v478 = vpop.f32.mrb[0].mxu0
    %v479 = vadd.f32 0.0, %v478
    %v480 = vpop.f32.mrb[0].mxu0
    %v481 = vpop.f32.mrb[0].mxu0
    %v482 = vpop.f32.mrb[0].mxu0
    %483 = vdwg.mxu0
    %v484 = vadd.f32 %v378, %v479
    %v485 = vld [vmem:[#allocation5] sm:$0xf]
    %v486 = vld [vmem:[#allocation5 + $0x4] sm:$0xf]
    %v487 = vld [vmem:[#allocation5 + $0x8] sm:$0xf]
    %v488 = vld [vmem:[#allocation5 + $0xc] sm:$0xf]
    %v489 = vld [vmem:[#allocation5 + $0x10] sm:$0xf]
    %v490 = vld [vmem:[#allocation5 + $0x14] sm:$0xf]
    %v491 = vld [vmem:[#allocation5 + $0x18] sm:$0xf]
    %v492 = vld [vmem:[#allocation5 + $0x1c] sm:$0xf]
    %v493 = vld [vmem:[#allocation5 + $0x20] sm:$0xf]
    %v494 = vld [vmem:[#allocation5 + $0x24] sm:$0xf]
    %v495 = vld [vmem:[#allocation5 + $0x28] sm:$0xf]
    %v496 = vld [vmem:[#allocation5 + $0x2c] sm:$0xf]
    %v497 = vld [vmem:[#allocation5 + $0x30] sm:$0xf]
    %v498 = vld [vmem:[#allocation5 + $0x34] sm:$0xf]
    %v499 = vld [vmem:[#allocation5 + $0x38] sm:$0xf]
    %v500 = vld [vmem:[#allocation5 + $0x3c] sm:$0xf]
    %v517 = vunpack.c.l.b16 %v485
    %v518 = vunpack.c.l.b16 %v486
    %v519 = vunpack.c.l.b16 %v487
    %v520 = vunpack.c.l.b16 %v488
    %v521 = vunpack.c.l.b16 %v489
    %v522 = vunpack.c.l.b16 %v490
    %v523 = vunpack.c.l.b16 %v491
    %v524 = vunpack.c.l.b16 %v492
    %v525 = vunpack.c.l.b16 %v493
    %v526 = vunpack.c.l.b16 %v494
    %v527 = vunpack.c.l.b16 %v495
    %v528 = vunpack.c.l.b16 %v496
    %v529 = vunpack.c.l.b16 %v497
    %v530 = vunpack.c.l.b16 %v498
    %v531 = vunpack.c.l.b16 %v499
    %v532 = vunpack.c.l.b16 %v500
    %v533 = vpack.c.b16 %v518, %v517
    %v534 = vpack.c.b16 %v520, %v519
    %v535 = vpack.c.b16 %v522, %v521
    %v536 = vpack.c.b16 %v524, %v523
    %v537 = vpack.c.b16 %v526, %v525
    %v538 = vpack.c.b16 %v528, %v527
    %v539 = vpack.c.b16 %v530, %v529
    %v540 = vpack.c.b16 %v532, %v531
    %549 = vmatprep.subr.bf16.mxu0 0
    %550 = vmatpush1.bf16.msra.mxu0 %v533
    %551 = vmatprep.subr.bf16.mxu0 0
    %552 = vmatpush1.bf16.msra.mxu0 %v534
    %553 = vmatprep.subr.bf16.mxu0 0
    %554 = vmatpush1.bf16.msra.mxu0 %v535
    %555 = vmatprep.subr.bf16.mxu0 0
    %556 = vmatpush1.bf16.msra.mxu0 %v536
    %557 = vmatprep.subr.bf16.mxu0 0
    %558 = vmatpush1.bf16.msra.mxu0 %v537
    %559 = vmatprep.subr.bf16.mxu0 0
    %560 = vmatpush1.bf16.msra.mxu0 %v538
    %561 = vmatprep.subr.bf16.mxu0 0
    %562 = vmatpush1.bf16.msra.mxu0 %v539
    %563 = vmatprep.subr.bf16.mxu0 0
    %564 = vmatpush1.bf16.msra.mxu0 %v540
    %565 = vmatprep.subr.bf16.mxu0 0
    %566 = vmatpush1.bf16.msra.mxu0 0
    %567 = vmatprep.subr.bf16.mxu0 0
    %568 = vmatpush1.bf16.msra.mxu0 0
    %569 = vmatprep.subr.bf16.mxu0 0
    %570 = vmatpush1.bf16.msra.mxu0 0
    %571 = vmatprep.subr.bf16.mxu0 0
    %572 = vmatpush1.bf16.msra.mxu0 0
    %573 = vmatprep.subr.bf16.mxu0 0
    %574 = vmatpush1.bf16.msra.mxu0 0
    %575 = vmatprep.subr.bf16.mxu0 0
    %576 = vmatpush1.bf16.msra.mxu0 0
    %577 = vmatprep.subr.bf16.mxu0 0
    %578 = vmatpush1.bf16.msra.mxu0 0
    %579 = vmatprep.subr.bf16.mxu0 0
    %580 = vmatpush1.bf16.msra.mxu0 0
    %581 = vmatprep.mubr.bf16.mxu0 0
    %582 = vmatmul.mubr.bf16.gmra.mrb[0].mxu0 0
    %v583 = vpop.f32.mrb[0].mxu0
    %v584 = vadd.f32 0.0, %v583
    %v585 = vpop.f32.mrb[0].mxu0
    %v586 = vpop.f32.mrb[0].mxu0
    %v587 = vpop.f32.mrb[0].mxu0
    %588 = vdwg.mxu0
    %v589 = vadd.f32 %v379, %v584
    %v590 = vmul.f32 %v484, 0.5
    %v591 = vsel %vm377, %v590, %v484
    %v592 = vtanh.pop %v591
    %v593 = vadd.f32 %v592, 1.0
    %v594 = vmul.f32 %v593, 0.5
    %v595 = vsel %vm377, %v594, %v592
    %596 = vrot.lane.b32.xlu0 %v595, 96
    %v597 = vpop.permute.xlu0 %596
    %598 = vrot.lane.b32.xlu0 %v595, 64
    %v599 = vpop.permute.xlu0 %598
    %600 = vrot.lane.b32.xlu0 %v595, 32
    %v601 = vpop.permute.xlu0 %600
    %v602 = vmul.f32 %v597, 0.0
    %v603 = vmul.f32 %v595, %v601
    %v604 = vadd.f32 %v602, %v603
    %v605 = vtanh.pop %v604
    %v606 = vmul.f32 %v599, %v605
    %v607 = vmul.f32 %v589, 0.5
    %v608 = vsel %vm377, %v607, %v589
    %v609 = vtanh.pop %v608
    %v610 = vadd.f32 %v609, 1.0
    %v611 = vmul.f32 %v610, 0.5
    %v612 = vsel %vm377, %v611, %v609
    %613 = vrot.lane.b32.xlu0 %v612, 96
    %v614 = vpop.permute.xlu0 %613
    %615 = vrot.lane.b32.xlu0 %v612, 64
    %v616 = vpop.permute.xlu0 %615
    %617 = vrot.lane.b32.xlu0 %v612, 32
    %v618 = vpop.permute.xlu0 %617
    %v619 = vmul.f32 %v614, 0.0
    %v620 = vmul.f32 %v612, %v618
    %v621 = vadd.f32 %v619, %v620
    %v622 = vtanh.pop %v621
    %v623 = vmul.f32 %v616, %v622
    %v624 = vadd.f32 %v606, 0.0
    %v625 = vadd.f32 %v623, 0.0
    %v626 = vld [vmem:[%s347] sm:$0xff]
    %v627 = vld [vmem:[%s369] sm:$0xff]
    %v628 = vpack.c.bf16 %v606, %v606
    %629 = vmatprep.subr.bf16.mxu0 0
    %630 = vmatpush1.bf16.msra.mxu0 %v428
    %631 = vmatprep.subr.bf16.mxu0 0
    %632 = vmatpush1.bf16.msra.mxu0 %v429
    %633 = vmatprep.subr.bf16.mxu0 0
    %634 = vmatpush1.bf16.msra.mxu0 %v430
    %635 = vmatprep.subr.bf16.mxu0 0
    %636 = vmatpush1.bf16.msra.mxu0 %v431
    %637 = vmatprep.subr.bf16.mxu0 0
    %638 = vmatpush1.bf16.msra.mxu0 %v432
    %639 = vmatprep.subr.bf16.mxu0 0
    %640 = vmatpush1.bf16.msra.mxu0 %v433
    %641 = vmatprep.subr.bf16.mxu0 0
    %642 = vmatpush1.bf16.msra.mxu0 %v434
    %643 = vmatprep.subr.bf16.mxu0 0
    %644 = vmatpush1.bf16.msra.mxu0 %v435
    %645 = vmatprep.subr.bf16.mxu0 0
    %646 = vmatpush1.bf16.msra.mxu0 0
    %647 = vmatprep.subr.bf16.mxu0 0
    %648 = vmatpush1.bf16.msra.mxu0 0
    %649 = vmatprep.subr.bf16.mxu0 0
    %650 = vmatpush1.bf16.msra.mxu0 0
    %651 = vmatprep.subr.bf16.mxu0 0
    %652 = vmatpush1.bf16.msra.mxu0 0
    %653 = vmatprep.subr.bf16.mxu0 0
    %654 = vmatpush1.bf16.msra.mxu0 0
    %655 = vmatprep.subr.bf16.mxu0 0
    %656 = vmatpush1.bf16.msra.mxu0 0
    %657 = vmatprep.subr.bf16.mxu0 0
    %658 = vmatpush1.bf16.msra.mxu0 0
    %659 = vmatprep.subr.bf16.mxu0 0
    %660 = vmatpush1.bf16.msra.mxu0 0
    %661 = vmatprep.mubr.bf16.mxu0 0
    %662 = vmatmul.mubr.bf16.gmra.mrb[0].mxu0 %v628
    %v663 = vpop.f32.mrb[0].mxu0
    %v664 = vadd.f32 0.0, %v663
    %v665 = vpop.f32.mrb[0].mxu0
    %v666 = vpop.f32.mrb[0].mxu0
    %v667 = vpop.f32.mrb[0].mxu0
    %668 = vdwg.mxu0
    %v669 = vadd.f32 %v626, %v664
    %v670 = vpack.c.bf16 %v623, %v623
    %671 = vmatprep.subr.bf16.mxu0 0
    %672 = vmatpush1.bf16.msra.mxu0 %v533
    %673 = vmatprep.subr.bf16.mxu0 0
    %674 = vmatpush1.bf16.msra.mxu0 %v534
    %675 = vmatprep.subr.bf16.mxu0 0
    %676 = vmatpush1.bf16.msra.mxu0 %v535
    %677 = vmatprep.subr.bf16.mxu0 0
    %678 = vmatpush1.bf16.msra.mxu0 %v536
    %679 = vmatprep.subr.bf16.mxu0 0
    %680 = vmatpush1.bf16.msra.mxu0 %v537
    %681 = vmatprep.subr.bf16.mxu0 0
    %682 = vmatpush1.bf16.msra.mxu0 %v538
    %683 = vmatprep.subr.bf16.mxu0 0
    %684 = vmatpush1.bf16.msra.mxu0 %v539
    %685 = vmatprep.subr.bf16.mxu0 0
    %686 = vmatpush1.bf16.msra.mxu0 %v540
    %687 = vmatprep.subr.bf16.mxu0 0
    %688 = vmatpush1.bf16.msra.mxu0 0
    %689 = vmatprep.subr.bf16.mxu0 0
    %690 = vmatpush1.bf16.msra.mxu0 0
    %691 = vmatprep.subr.bf16.mxu0 0
    %692 = vmatpush1.bf16.msra.mxu0 0
    %693 = vmatprep.subr.bf16.mxu0 0
    %694 = vmatpush1.bf16.msra.mxu0 0
    %695 = vmatprep.subr.bf16.mxu0 0
    %696 = vmatpush1.bf16.msra.mxu0 0
    %697 = vmatprep.subr.bf16.mxu0 0
    %698 = vmatpush1.bf16.msra.mxu0 0
    %699 = vmatprep.subr.bf16.mxu0 0
    %700 = vmatpush1.bf16.msra.mxu0 0
    %701 = vmatprep.subr.bf16.mxu0 0
    %702 = vmatpush1.bf16.msra.mxu0 0
    %703 = vmatprep.mubr.bf16.mxu0 0
    %704 = vmatmul.mubr.bf16.gmra.mrb[0].mxu0 %v670
    %v705 = vpop.f32.mrb[0].mxu0
    %v706 = vadd.f32 0.0, %v705
    %v707 = vpop.f32.mrb[0].mxu0
    %v708 = vpop.f32.mrb[0].mxu0
    %v709 = vpop.f32.mrb[0].mxu0
    %710 = vdwg.mxu0
    %v711 = vadd.f32 %v627, %v706
    %v712 = vmul.f32 %v669, 0.5
    %v713 = vsel %vm377, %v712, %v669
    %v714 = vtanh.pop %v713
    %v715 = vadd.f32 %v714, 1.0
    %v716 = vmul.f32 %v715, 0.5
    %v717 = vsel %vm377, %v716, %v714
    %718 = vrot.lane.b32.xlu0 %v717, 96
    %v719 = vpop.permute.xlu0 %718
    %720 = vrot.lane.b32.xlu0 %v717, 64
    %v721 = vpop.permute.xlu0 %720
    %722 = vrot.lane.b32.xlu0 %v717, 32
    %v723 = vpop.permute.xlu0 %722
    %v724 = vmul.f32 %v719, %v604
    %v725 = vmul.f32 %v717, %v723
    %v726 = vadd.f32 %v724, %v725
    %v727 = vtanh.pop %v726
    %v728 = vmul.f32 %v721, %v727
    %v729 = vmul.f32 %v711, 0.5
    %v730 = vsel %vm377, %v729, %v711
    %v731 = vtanh.pop %v730
    %v732 = vadd.f32 %v731, 1.0
    %v733 = vmul.f32 %v732, 0.5
    %v734 = vsel %vm377, %v733, %v731
    %735 = vrot.lane.b32.xlu0 %v734, 96
    %v736 = vpop.permute.xlu0 %735
    %737 = vrot.lane.b32.xlu0 %v734, 64
    %v738 = vpop.permute.xlu0 %737
    %739 = vrot.lane.b32.xlu0 %v734, 32
    %v740 = vpop.permute.xlu0 %739
    %v741 = vmul.f32 %v736, %v621
    %v742 = vmul.f32 %v734, %v740
    %v743 = vadd.f32 %v741, %v742
    %v744 = vtanh.pop %v743
    %v745 = vmul.f32 %v738, %v744
    %v746 = vadd.f32 %v624, %v728
    %v747 = vadd.f32 %v625, %v745
    %v748 = vld [vmem:[%s351] sm:$0xff]
    %v749 = vld [vmem:[%s365] sm:$0xff]
    %v750 = vpack.c.bf16 %v728, %v728
    %751 = vmatprep.subr.bf16.mxu0 0
    %752 = vmatpush1.bf16.msra.mxu0 %v428
    %753 = vmatprep.subr.bf16.mxu0 0
    %754 = vmatpush1.bf16.msra.mxu0 %v429
    %755 = vmatprep.subr.bf16.mxu0 0
    %756 = vmatpush1.bf16.msra.mxu0 %v430
    %757 = vmatprep.subr.bf16.mxu0 0
    %758 = vmatpush1.bf16.msra.mxu0 %v431
    %759 = vmatprep.subr.bf16.mxu0 0
    %760 = vmatpush1.bf16.msra.mxu0 %v432
    %761 = vmatprep.subr.bf16.mxu0 0
    %762 = vmatpush1.bf16.msra.mxu0 %v433
    %763 = vmatprep.subr.bf16.mxu0 0
    %764 = vmatpush1.bf16.msra.mxu0 %v434
    %765 = vmatprep.subr.bf16.mxu0 0
    %766 = vmatpush1.bf16.msra.mxu0 %v435
    %767 = vmatprep.subr.bf16.mxu0 0
    %768 = vmatpush1.bf16.msra.mxu0 0
    %769 = vmatprep.subr.bf16.mxu0 0
    %770 = vmatpush1.bf16.msra.mxu0 0
    %771 = vmatprep.subr.bf16.mxu0 0
    %772 = vmatpush1.bf16.msra.mxu0 0
    %773 = vmatprep.subr.bf16.mxu0 0
    %774 = vmatpush1.bf16.msra.mxu0 0
    %775 = vmatprep.subr.bf16.mxu0 0
    %776 = vmatpush1.bf16.msra.mxu0 0
    %777 = vmatprep.subr.bf16.mxu0 0
    %778 = vmatpush1.bf16.msra.mxu0 0
    %779 = vmatprep.subr.bf16.mxu0 0
    %780 = vmatpush1.bf16.msra.mxu0 0
    %781 = vmatprep.subr.bf16.mxu0 0
    %782 = vmatpush1.bf16.msra.mxu0 0
    %783 = vmatprep.mubr.bf16.mxu0 0
    %784 = vmatmul.mubr.bf16.gmra.mrb[0].mxu0 %v750
    %v785 = vpop.f32.mrb[0].mxu0
    %v786 = vadd.f32 0.0, %v785
    %v787 = vpop.f32.mrb[0].mxu0
    %v788 = vpop.f32.mrb[0].mxu0
    %v789 = vpop.f32.mrb[0].mxu0
    %790 = vdwg.mxu0
    %v791 = vadd.f32 %v748, %v786
    %v792 = vpack.c.bf16 %v745, %v745
    %793 = vmatprep.subr.bf16.mxu0 0
    %794 = vmatpush1.bf16.msra.mxu0 %v533
    %795 = vmatprep.subr.bf16.mxu0 0
    %796 = vmatpush1.bf16.msra.mxu0 %v534
    %797 = vmatprep.subr.bf16.mxu0 0
    %798 = vmatpush1.bf16.msra.mxu0 %v535
    %799 = vmatprep.subr.bf16.mxu0 0
    %800 = vmatpush1.bf16.msra.mxu0 %v536
    %801 = vmatprep.subr.bf16.mxu0 0
    %802 = vmatpush1.bf16.msra.mxu0 %v537
    %803 = vmatprep.subr.bf16.mxu0 0
    %804 = vmatpush1.bf16.msra.mxu0 %v538
    %805 = vmatprep.subr.bf16.mxu0 0
    %806 = vmatpush1.bf16.msra.mxu0 %v539
    %807 = vmatprep.subr.bf16.mxu0 0
    %808 = vmatpush1.bf16.msra.mxu0 %v540
    %809 = vmatprep.subr.bf16.mxu0 0
    %810 = vmatpush1.bf16.msra.mxu0 0
    %811 = vmatprep.subr.bf16.mxu0 0
    %812 = vmatpush1.bf16.msra.mxu0 0
    %813 = vmatprep.subr.bf16.mxu0 0
    %814 = vmatpush1.bf16.msra.mxu0 0
    %815 = vmatprep.subr.bf16.mxu0 0
    %816 = vmatpush1.bf16.msra.mxu0 0
    %817 = vmatprep.subr.bf16.mxu0 0
    %818 = vmatpush1.bf16.msra.mxu0 0
    %819 = vmatprep.subr.bf16.mxu0 0
    %820 = vmatpush1.bf16.msra.mxu0 0
    %821 = vmatprep.subr.bf16.mxu0 0
    %822 = vmatpush1.bf16.msra.mxu0 0
    %823 = vmatprep.subr.bf16.mxu0 0
    %824 = vmatpush1.bf16.msra.mxu0 0
    %825 = vmatprep.mubr.bf16.mxu0 0
    %826 = vmatmul.mubr.bf16.gmra.mrb[0].mxu0 %v792
    %v827 = vpop.f32.mrb[0].mxu0
    %v828 = vadd.f32 0.0, %v827
    %v829 = vpop.f32.mrb[0].mxu0
    %v830 = vpop.f32.mrb[0].mxu0
    %v831 = vpop.f32.mrb[0].mxu0
    %832 = vdwg.mxu0
    %v833 = vadd.f32 %v749, %v828
    %v834 = vmul.f32 %v791, 0.5
    %v835 = vsel %vm377, %v834, %v791
    %v836 = vtanh.pop %v835
    %v837 = vadd.f32 %v836, 1.0
    %v838 = vmul.f32 %v837, 0.5
    %v839 = vsel %vm377, %v838, %v836
    %840 = vrot.lane.b32.xlu0 %v839, 96
    %v841 = vpop.permute.xlu0 %840
    %842 = vrot.lane.b32.xlu0 %v839, 64
    %v843 = vpop.permute.xlu0 %842
    %844 = vrot.lane.b32.xlu0 %v839, 32
    %v845 = vpop.permute.xlu0 %844
    %v846 = vmul.f32 %v841, %v726
    %v847 = vmul.f32 %v839, %v845
    %v848 = vadd.f32 %v846, %v847
    %v849 = vtanh.pop %v848
    %v850 = vmul.f32 %v843, %v849
    %v851 = vmul.f32 %v833, 0.5
    %v852 = vsel %vm377, %v851, %v833
    %v853 = vtanh.pop %v852
    %v854 = vadd.f32 %v853, 1.0
    %v855 = vmul.f32 %v854, 0.5
    %v856 = vsel %vm377, %v855, %v853
    %857 = vrot.lane.b32.xlu0 %v856, 96
    %v858 = vpop.permute.xlu0 %857
    %859 = vrot.lane.b32.xlu0 %v856, 64
    %v860 = vpop.permute.xlu0 %859
    %861 = vrot.lane.b32.xlu0 %v856, 32
    %v862 = vpop.permute.xlu0 %861
    %v863 = vmul.f32 %v858, %v743
    %v864 = vmul.f32 %v856, %v862
    %v865 = vadd.f32 %v863, %v864
    %v866 = vtanh.pop %v865
    %v867 = vmul.f32 %v860, %v866
    %v868 = vadd.f32 %v746, %v850
    %v869 = vadd.f32 %v747, %v867
    %v870 = vld [vmem:[%s355] sm:$0xff]
    %v871 = vld [vmem:[%s361] sm:$0xff]
    %v872 = vpack.c.bf16 %v850, %v850
    %873 = vmatprep.subr.bf16.mxu0 0
    %874 = vmatpush1.bf16.msra.mxu0 %v428
    %875 = vmatprep.subr.bf16.mxu0 0
    %876 = vmatpush1.bf16.msra.mxu0 %v429
    %877 = vmatprep.subr.bf16.mxu0 0
    %878 = vmatpush1.bf16.msra.mxu0 %v430
    %879 = vmatprep.subr.bf16.mxu0 0
    %880 = vmatpush1.bf16.msra.mxu0 %v431
    %881 = vmatprep.subr.bf16.mxu0 0
    %882 = vmatpush1.bf16.msra.mxu0 %v432
    %883 = vmatprep.subr.bf16.mxu0 0
    %884 = vmatpush1.bf16.msra.mxu0 %v433
    %885 = vmatprep.subr.bf16.mxu0 0
    %886 = vmatpush1.bf16.msra.mxu0 %v434
    %887 = vmatprep.subr.bf16.mxu0 0
    %888 = vmatpush1.bf16.msra.mxu0 %v435
    %889 = vmatprep.subr.bf16.mxu0 0
    %890 = vmatpush1.bf16.msra.mxu0 0
    %891 = vmatprep.subr.bf16.mxu0 0
    %892 = vmatpush1.bf16.msra.mxu0 0
    %893 = vmatprep.subr.bf16.mxu0 0
    %894 = vmatpush1.bf16.msra.mxu0 0
    %895 = vmatprep.subr.bf16.mxu0 0
    %896 = vmatpush1.bf16.msra.mxu0 0
    %897 = vmatprep.subr.bf16.mxu0 0
    %898 = vmatpush1.bf16.msra.mxu0 0
    %899 = vmatprep.subr.bf16.mxu0 0
    %900 = vmatpush1.bf16.msra.mxu0 0
    %901 = vmatprep.subr.bf16.mxu0 0
    %902 = vmatpush1.bf16.msra.mxu0 0
    %903 = vmatprep.subr.bf16.mxu0 0
    %904 = vmatpush1.bf16.msra.mxu0 0
    %905 = vmatprep.mubr.bf16.mxu0 0
    %906 = vmatmul.mubr.bf16.gmra.mrb[0].mxu0 %v872
    %v907 = vpop.f32.mrb[0].mxu0
    %v908 = vadd.f32 0.0, %v907
    %v909 = vpop.f32.mrb[0].mxu0
    %v910 = vpop.f32.mrb[0].mxu0
    %v911 = vpop.f32.mrb[0].mxu0
    %912 = vdwg.mxu0
    %v913 = vadd.f32 %v870, %v908
    %v914 = vpack.c.bf16 %v867, %v867
    %915 = vmatprep.subr.bf16.mxu0 0
    %916 = vmatpush1.bf16.msra.mxu0 %v533
    %917 = vmatprep.subr.bf16.mxu0 0
    %918 = vmatpush1.bf16.msra.mxu0 %v534
    %919 = vmatprep.subr.bf16.mxu0 0
    %920 = vmatpush1.bf16.msra.mxu0 %v535
    %921 = vmatprep.subr.bf16.mxu0 0
    %922 = vmatpush1.bf16.msra.mxu0 %v536
    %923 = vmatprep.subr.bf16.mxu0 0
    %924 = vmatpush1.bf16.msra.mxu0 %v537
    %925 = vmatprep.subr.bf16.mxu0 0
    %926 = vmatpush1.bf16.msra.mxu0 %v538
    %927 = vmatprep.subr.bf16.mxu0 0
    %928 = vmatpush1.bf16.msra.mxu0 %v539
    %929 = vmatprep.subr.bf16.mxu0 0
    %930 = vmatpush1.bf16.msra.mxu0 %v540
    %931 = vmatprep.subr.bf16.mxu0 0
    %932 = vmatpush1.bf16.msra.mxu0 0
    %933 = vmatprep.subr.bf16.mxu0 0
    %934 = vmatpush1.bf16.msra.mxu0 0
    %935 = vmatprep.subr.bf16.mxu0 0
    %936 = vmatpush1.bf16.msra.mxu0 0
    %937 = vmatprep.subr.bf16.mxu0 0
    %938 = vmatpush1.bf16.msra.mxu0 0
    %939 = vmatprep.subr.bf16.mxu0 0
    %940 = vmatpush1.bf16.msra.mxu0 0
    %941 = vmatprep.subr.bf16.mxu0 0
    %942 = vmatpush1.bf16.msra.mxu0 0
    %943 = vmatprep.subr.bf16.mxu0 0
    %944 = vmatpush1.bf16.msra.mxu0 0
    %945 = vmatprep.subr.bf16.mxu0 0
    %946 = vmatpush1.bf16.msra.mxu0 0
    %947 = vmatprep.mubr.bf16.mxu0 0
    %948 = vmatmul.mubr.bf16.gmra.mrb[0].mxu0 %v914
    %v949 = vpop.f32.mrb[0].mxu0
    %v950 = vadd.f32 0.0, %v949
    %v951 = vpop.f32.mrb[0].mxu0
    %v952 = vpop.f32.mrb[0].mxu0
    %v953 = vpop.f32.mrb[0].mxu0
    %954 = vdwg.mxu0
    %v955 = vadd.f32 %v871, %v950
    %v956 = vmul.f32 %v913, 0.5
    %v957 = vsel %vm377, %v956, %v913
    %v958 = vtanh.pop %v957
    %v959 = vadd.f32 %v958, 1.0
    %v960 = vmul.f32 %v959, 0.5
    %v961 = vsel %vm377, %v960, %v958
    %962 = vrot.lane.b32.xlu0 %v961, 96
    %v963 = vpop.permute.xlu0 %962
    %964 = vrot.lane.b32.xlu0 %v961, 64
    %v965 = vpop.permute.xlu0 %964
    %966 = vrot.lane.b32.xlu0 %v961, 32
    %v967 = vpop.permute.xlu0 %966
    %v968 = vmul.f32 %v963, %v848
    %v969 = vmul.f32 %v961, %v967
    %v970 = vadd.f32 %v968, %v969
    %v971 = vtanh.pop %v970
    %v972 = vmul.f32 %v965, %v971
    %v973 = vmul.f32 %v955, 0.5
    %v974 = vsel %vm377, %v973, %v955
    %v975 = vtanh.pop %v974
    %v976 = vadd.f32 %v975, 1.0
    %v977 = vmul.f32 %v976, 0.5
    %v978 = vsel %vm377, %v977, %v975
    %979 = vrot.lane.b32.xlu0 %v978, 96
    %v980 = vpop.permute.xlu0 %979
    %981 = vrot.lane.b32.xlu0 %v978, 64
    %v982 = vpop.permute.xlu0 %981
    %983 = vrot.lane.b32.xlu0 %v978, 32
    %v984 = vpop.permute.xlu0 %983
    %v985 = vmul.f32 %v980, %v865
    %v986 = vmul.f32 %v978, %v984
    %v987 = vadd.f32 %v985, %v986
    %v988 = vtanh.pop %v987
    %v989 = vmul.f32 %v982, %v988
    %v990 = vadd.f32 %v868, %v972
    %v991 = vadd.f32 %v869, %v989
    %v992 = vld [vmem:[%s359] sm:$0xff]
    %v993 = vld [vmem:[%s357] sm:$0xff]
    %v994 = vpack.c.bf16 %v972, %v972
    %995 = vmatprep.subr.bf16.mxu0 0
    %996 = vmatpush1.bf16.msra.mxu0 %v428
    %997 = vmatprep.subr.bf16.mxu0 0
    %998 = vmatpush1.bf16.msra.mxu0 %v429
    %999 = vmatprep.subr.bf16.mxu0 0
    %1000 = vmatpush1.bf16.msra.mxu0 %v430
    %1001 = vmatprep.subr.bf16.mxu0 0
    %1002 = vmatpush1.bf16.msra.mxu0 %v431
    %1003 = vmatprep.subr.bf16.mxu0 0
    %1004 = vmatpush1.bf16.msra.mxu0 %v432
    %1005 = vmatprep.subr.bf16.mxu0 0
    %1006 = vmatpush1.bf16.msra.mxu0 %v433
    %1007 = vmatprep.subr.bf16.mxu0 0
    %1008 = vmatpush1.bf16.msra.mxu0 %v434
    %1009 = vmatprep.subr.bf16.mxu0 0
    %1010 = vmatpush1.bf16.msra.mxu0 %v435
    %1011 = vmatprep.subr.bf16.mxu0 0
    %1012 = vmatpush1.bf16.msra.mxu0 0
    %1013 = vmatprep.subr.bf16.mxu0 0
    %1014 = vmatpush1.bf16.msra.mxu0 0
    %1015 = vmatprep.subr.bf16.mxu0 0
    %1016 = vmatpush1.bf16.msra.mxu0 0
    %1017 = vmatprep.subr.bf16.mxu0 0
    %1018 = vmatpush1.bf16.msra.mxu0 0
    %1019 = vmatprep.subr.bf16.mxu0 0
    %1020 = vmatpush1.bf16.msra.mxu0 0
    %1021 = vmatprep.subr.bf16.mxu0 0
    %1022 = vmatpush1.bf16.msra.mxu0 0
    %1023 = vmatprep.subr.bf16.mxu0 0
    %1024 = vmatpush1.bf16.msra.mxu0 0
    %1025 = vmatprep.subr.bf16.mxu0 0
    %1026 = vmatpush1.bf16.msra.mxu0 0
    %1027 = vmatprep.mubr.bf16.mxu0 0
    %1028 = vmatmul.mubr.bf16.gmra.mrb[0].mxu0 %v994
    %v1029 = vpop.f32.mrb[0].mxu0
    %v1030 = vadd.f32 0.0, %v1029
    %v1031 = vpop.f32.mrb[0].mxu0
    %v1032 = vpop.f32.mrb[0].mxu0
    %v1033 = vpop.f32.mrb[0].mxu0
    %1034 = vdwg.mxu0
    %v1035 = vadd.f32 %v992, %v1030
    %v1036 = vpack.c.bf16 %v989, %v989
    %1037 = vmatprep.subr.bf16.mxu0 0
    %1038 = vmatpush1.bf16.msra.mxu0 %v533
    %1039 = vmatprep.subr.bf16.mxu0 0
    %1040 = vmatpush1.bf16.msra.mxu0 %v534
    %1041 = vmatprep.subr.bf16.mxu0 0
    %1042 = vmatpush1.bf16.msra.mxu0 %v535
    %1043 = vmatprep.subr.bf16.mxu0 0
    %1044 = vmatpush1.bf16.msra.mxu0 %v536
    %1045 = vmatprep.subr.bf16.mxu0 0
    %1046 = vmatpush1.bf16.msra.mxu0 %v537
    %1047 = vmatprep.subr.bf16.mxu0 0
    %1048 = vmatpush1.bf16.msra.mxu0 %v538
    %1049 = vmatprep.subr.bf16.mxu0 0
    %1050 = vmatpush1.bf16.msra.mxu0 %v539
    %1051 = vmatprep.subr.bf16.mxu0 0
    %1052 = vmatpush1.bf16.msra.mxu0 %v540
    %1053 = vmatprep.subr.bf16.mxu0 0
    %1054 = vmatpush1.bf16.msra.mxu0 0
    %1055 = vmatprep.subr.bf16.mxu0 0
    %1056 = vmatpush1.bf16.msra.mxu0 0
    %1057 = vmatprep.subr.bf16.mxu0 0
    %1058 = vmatpush1.bf16.msra.mxu0 0
    %1059 = vmatprep.subr.bf16.mxu0 0
    %1060 = vmatpush1.bf16.msra.mxu0 0
    %1061 = vmatprep.subr.bf16.mxu0 0
    %1062 = vmatpush1.bf16.msra.mxu0 0
    %1063 = vmatprep.subr.bf16.mxu0 0
    %1064 = vmatpush1.bf16.msra.mxu0 0
    %1065 = vmatprep.subr.bf16.mxu0 0
    %1066 = vmatpush1.bf16.msra.mxu0 0
    %1067 = vmatprep.subr.bf16.mxu0 0
    %1068 = vmatpush1.bf16.msra.mxu0 0
    %1069 = vmatprep.mubr.bf16.mxu0 0
    %1070 = vmatmul.mubr.bf16.gmra.mrb[0].mxu0 %v1036
    %v1071 = vpop.f32.mrb[0].mxu0
    %v1072 = vadd.f32 0.0, %v1071
    %v1073 = vpop.f32.mrb[0].mxu0
    %v1074 = vpop.f32.mrb[0].mxu0
    %v1075 = vpop.f32.mrb[0].mxu0
    %1076 = vdwg.mxu0
    %v1077 = vadd.f32 %v993, %v1072
    %v1078 = vmul.f32 %v1035, 0.5
    %v1079 = vsel %vm377, %v1078, %v1035
    %v1080 = vtanh.pop %v1079
    %v1081 = vadd.f32 %v1080, 1.0
    %v1082 = vmul.f32 %v1081, 0.5
    %v1083 = vsel %vm377, %v1082, %v1080
    %1084 = vrot.lane.b32.xlu0 %v1083, 96
    %v1085 = vpop.permute.xlu0 %1084
    %1086 = vrot.lane.b32.xlu0 %v1083, 64
    %v1087 = vpop.permute.xlu0 %1086
    %1088 = vrot.lane.b32.xlu0 %v1083, 32
    %v1089 = vpop.permute.xlu0 %1088
    %v1090 = vmul.f32 %v1085, %v970
    %v1091 = vmul.f32 %v1083, %v1089
    %v1092 = vadd.f32 %v1090, %v1091
    %v1093 = vtanh.pop %v1092
    %v1094 = vmul.f32 %v1087, %v1093
    %v1095 = vmul.f32 %v1077, 0.5
    %v1096 = vsel %vm377, %v1095, %v1077
    %v1097 = vtanh.pop %v1096
    %v1098 = vadd.f32 %v1097, 1.0
    %v1099 = vmul.f32 %v1098, 0.5
    %v1100 = vsel %vm377, %v1099, %v1097
    %1101 = vrot.lane.b32.xlu0 %v1100, 96
    %v1102 = vpop.permute.xlu0 %1101
    %1103 = vrot.lane.b32.xlu0 %v1100, 64
    %v1104 = vpop.permute.xlu0 %1103
    %1105 = vrot.lane.b32.xlu0 %v1100, 32
    %v1106 = vpop.permute.xlu0 %1105
    %v1107 = vmul.f32 %v1102, %v987
    %v1108 = vmul.f32 %v1100, %v1106
    %v1109 = vadd.f32 %v1107, %v1108
    %v1110 = vtanh.pop %v1109
    %v1111 = vmul.f32 %v1104, %v1110
    %v1112 = vadd.f32 %v990, %v1094
    %v1113 = vadd.f32 %v991, %v1111
    %v1114 = vld [vmem:[%s363] sm:$0xff]
    %v1115 = vld [vmem:[%s353] sm:$0xff]
    %v1116 = vpack.c.bf16 %v1094, %v1094
    %1117 = vmatprep.subr.bf16.mxu0 0
    %1118 = vmatpush1.bf16.msra.mxu0 %v428
    %1119 = vmatprep.subr.bf16.mxu0 0
    %1120 = vmatpush1.bf16.msra.mxu0 %v429
    %1121 = vmatprep.subr.bf16.mxu0 0
    %1122 = vmatpush1.bf16.msra.mxu0 %v430
    %1123 = vmatprep.subr.bf16.mxu0 0
    %1124 = vmatpush1.bf16.msra.mxu0 %v431
    %1125 = vmatprep.subr.bf16.mxu0 0
    %1126 = vmatpush1.bf16.msra.mxu0 %v432
    %1127 = vmatprep.subr.bf16.mxu0 0
    %1128 = vmatpush1.bf16.msra.mxu0 %v433
    %1129 = vmatprep.subr.bf16.mxu0 0
    %1130 = vmatpush1.bf16.msra.mxu0 %v434
    %1131 = vmatprep.subr.bf16.mxu0 0
    %1132 = vmatpush1.bf16.msra.mxu0 %v435
    %1133 = vmatprep.subr.bf16.mxu0 0
    %1134 = vmatpush1.bf16.msra.mxu0 0
    %1135 = vmatprep.subr.bf16.mxu0 0
    %1136 = vmatpush1.bf16.msra.mxu0 0
    %1137 = vmatprep.subr.bf16.mxu0 0
    %1138 = vmatpush1.bf16.msra.mxu0 0
    %1139 = vmatprep.subr.bf16.mxu0 0
    %1140 = vmatpush1.bf16.msra.mxu0 0
    %1141 = vmatprep.subr.bf16.mxu0 0
    %1142 = vmatpush1.bf16.msra.mxu0 0
    %1143 = vmatprep.subr.bf16.mxu0 0
    %1144 = vmatpush1.bf16.msra.mxu0 0
    %1145 = vmatprep.subr.bf16.mxu0 0
    %1146 = vmatpush1.bf16.msra.mxu0 0
    %1147 = vmatprep.subr.bf16.mxu0 0
    %1148 = vmatpush1.bf16.msra.mxu0 0
    %1149 = vmatprep.mubr.bf16.mxu0 0
    %1150 = vmatmul.mubr.bf16.gmra.mrb[0].mxu0 %v1116
    %v1151 = vpop.f32.mrb[0].mxu0
    %v1152 = vadd.f32 0.0, %v1151
    %v1153 = vpop.f32.mrb[0].mxu0
    %v1154 = vpop.f32.mrb[0].mxu0
    %v1155 = vpop.f32.mrb[0].mxu0
    %1156 = vdwg.mxu0
    %v1157 = vadd.f32 %v1114, %v1152
    %v1158 = vpack.c.bf16 %v1111, %v1111
    %1159 = vmatprep.subr.bf16.mxu0 0
    %1160 = vmatpush1.bf16.msra.mxu0 %v533
    %1161 = vmatprep.subr.bf16.mxu0 0
    %1162 = vmatpush1.bf16.msra.mxu0 %v534
    %1163 = vmatprep.subr.bf16.mxu0 0
    %1164 = vmatpush1.bf16.msra.mxu0 %v535
    %1165 = vmatprep.subr.bf16.mxu0 0
    %1166 = vmatpush1.bf16.msra.mxu0 %v536
    %1167 = vmatprep.subr.bf16.mxu0 0
    %1168 = vmatpush1.bf16.msra.mxu0 %v537
    %1169 = vmatprep.subr.bf16.mxu0 0
    %1170 = vmatpush1.bf16.msra.mxu0 %v538
    %1171 = vmatprep.subr.bf16.mxu0 0
    %1172 = vmatpush1.bf16.msra.mxu0 %v539
    %1173 = vmatprep.subr.bf16.mxu0 0
    %1174 = vmatpush1.bf16.msra.mxu0 %v540
    %1175 = vmatprep.subr.bf16.mxu0 0
    %1176 = vmatpush1.bf16.msra.mxu0 0
    %1177 = vmatprep.subr.bf16.mxu0 0
    %1178 = vmatpush1.bf16.msra.mxu0 0
    %1179 = vmatprep.subr.bf16.mxu0 0
    %1180 = vmatpush1.bf16.msra.mxu0 0
    %1181 = vmatprep.subr.bf16.mxu0 0
    %1182 = vmatpush1.bf16.msra.mxu0 0
    %1183 = vmatprep.subr.bf16.mxu0 0
    %1184 = vmatpush1.bf16.msra.mxu0 0
    %1185 = vmatprep.subr.bf16.mxu0 0
    %1186 = vmatpush1.bf16.msra.mxu0 0
    %1187 = vmatprep.subr.bf16.mxu0 0
    %1188 = vmatpush1.bf16.msra.mxu0 0
    %1189 = vmatprep.subr.bf16.mxu0 0
    %1190 = vmatpush1.bf16.msra.mxu0 0
    %1191 = vmatprep.mubr.bf16.mxu0 0
    %1192 = vmatmul.mubr.bf16.gmra.mrb[0].mxu0 %v1158
    %v1193 = vpop.f32.mrb[0].mxu0
    %v1194 = vadd.f32 0.0, %v1193
    %v1195 = vpop.f32.mrb[0].mxu0
    %v1196 = vpop.f32.mrb[0].mxu0
    %v1197 = vpop.f32.mrb[0].mxu0
    %1198 = vdwg.mxu0
    %v1199 = vadd.f32 %v1115, %v1194
    %v1200 = vmul.f32 %v1157, 0.5
    %v1201 = vsel %vm377, %v1200, %v1157
    %v1202 = vtanh.pop %v1201
    %v1203 = vadd.f32 %v1202, 1.0
    %v1204 = vmul.f32 %v1203, 0.5
    %v1205 = vsel %vm377, %v1204, %v1202
    %1206 = vrot.lane.b32.xlu0 %v1205, 96
    %v1207 = vpop.permute.xlu0 %1206
    %1208 = vrot.lane.b32.xlu0 %v1205, 64
    %v1209 = vpop.permute.xlu0 %1208
    %1210 = vrot.lane.b32.xlu0 %v1205, 32
    %v1211 = vpop.permute.xlu0 %1210
    %v1212 = vmul.f32 %v1207, %v1092
    %v1213 = vmul.f32 %v1205, %v1211
    %v1214 = vadd.f32 %v1212, %v1213
    %v1215 = vtanh.pop %v1214
    %v1216 = vmul.f32 %v1209, %v1215
    %v1217 = vmul.f32 %v1199, 0.5
    %v1218 = vsel %vm377, %v1217, %v1199
    %v1219 = vtanh.pop %v1218
    %v1220 = vadd.f32 %v1219, 1.0
    %v1221 = vmul.f32 %v1220, 0.5
    %v1222 = vsel %vm377, %v1221, %v1219
    %1223 = vrot.lane.b32.xlu0 %v1222, 96
    %v1224 = vpop.permute.xlu0 %1223
    %1225 = vrot.lane.b32.xlu0 %v1222, 64
    %v1226 = vpop.permute.xlu0 %1225
    %1227 = vrot.lane.b32.xlu0 %v1222, 32
    %v1228 = vpop.permute.xlu0 %1227
    %v1229 = vmul.f32 %v1224, %v1109
    %v1230 = vmul.f32 %v1222, %v1228
    %v1231 = vadd.f32 %v1229, %v1230
    %v1232 = vtanh.pop %v1231
    %v1233 = vmul.f32 %v1226, %v1232
    %v1234 = vadd.f32 %v1112, %v1216
    %v1235 = vadd.f32 %v1113, %v1233
    %v1236 = vld [vmem:[%s367] sm:$0xff]
    %v1237 = vld [vmem:[%s349] sm:$0xff]
    %v1238 = vpack.c.bf16 %v1216, %v1216
    %1239 = vmatprep.subr.bf16.mxu0 0
    %1240 = vmatpush1.bf16.msra.mxu0 %v428
    %1241 = vmatprep.subr.bf16.mxu0 0
    %1242 = vmatpush1.bf16.msra.mxu0 %v429
    %1243 = vmatprep.subr.bf16.mxu0 0
    %1244 = vmatpush1.bf16.msra.mxu0 %v430
    %1245 = vmatprep.subr.bf16.mxu0 0
    %1246 = vmatpush1.bf16.msra.mxu0 %v431
    %1247 = vmatprep.subr.bf16.mxu0 0
    %1248 = vmatpush1.bf16.msra.mxu0 %v432
    %1249 = vmatprep.subr.bf16.mxu0 0
    %1250 = vmatpush1.bf16.msra.mxu0 %v433
    %1251 = vmatprep.subr.bf16.mxu0 0
    %1252 = vmatpush1.bf16.msra.mxu0 %v434
    %1253 = vmatprep.subr.bf16.mxu0 0
    %1254 = vmatpush1.bf16.msra.mxu0 %v435
    %1255 = vmatprep.subr.bf16.mxu0 0
    %1256 = vmatpush1.bf16.msra.mxu0 0
    %1257 = vmatprep.subr.bf16.mxu0 0
    %1258 = vmatpush1.bf16.msra.mxu0 0
    %1259 = vmatprep.subr.bf16.mxu0 0
    %1260 = vmatpush1.bf16.msra.mxu0 0
    %1261 = vmatprep.subr.bf16.mxu0 0
    %1262 = vmatpush1.bf16.msra.mxu0 0
    %1263 = vmatprep.subr.bf16.mxu0 0
    %1264 = vmatpush1.bf16.msra.mxu0 0
    %1265 = vmatprep.subr.bf16.mxu0 0
    %1266 = vmatpush1.bf16.msra.mxu0 0
    %1267 = vmatprep.subr.bf16.mxu0 0
    %1268 = vmatpush1.bf16.msra.mxu0 0
    %1269 = vmatprep.subr.bf16.mxu0 0
    %1270 = vmatpush1.bf16.msra.mxu0 0
    %1271 = vmatprep.mubr.bf16.mxu0 0
    %1272 = vmatmul.mubr.bf16.gmra.mrb[0].mxu0 %v1238
    %v1273 = vpop.f32.mrb[0].mxu0
    %v1274 = vadd.f32 0.0, %v1273
    %v1275 = vpop.f32.mrb[0].mxu0
    %v1276 = vpop.f32.mrb[0].mxu0
    %v1277 = vpop.f32.mrb[0].mxu0
    %1278 = vdwg.mxu0
    %v1279 = vadd.f32 %v1236, %v1274
    %v1280 = vpack.c.bf16 %v1233, %v1233
    %1281 = vmatprep.subr.bf16.mxu0 0
    %1282 = vmatpush1.bf16.msra.mxu0 %v533
    %1283 = vmatprep.subr.bf16.mxu0 0
    %1284 = vmatpush1.bf16.msra.mxu0 %v534
    %1285 = vmatprep.subr.bf16.mxu0 0
    %1286 = vmatpush1.bf16.msra.mxu0 %v535
    %1287 = vmatprep.subr.bf16.mxu0 0
    %1288 = vmatpush1.bf16.msra.mxu0 %v536
    %1289 = vmatprep.subr.bf16.mxu0 0
    %1290 = vmatpush1.bf16.msra.mxu0 %v537
    %1291 = vmatprep.subr.bf16.mxu0 0
    %1292 = vmatpush1.bf16.msra.mxu0 %v538
    %1293 = vmatprep.subr.bf16.mxu0 0
    %1294 = vmatpush1.bf16.msra.mxu0 %v539
    %1295 = vmatprep.subr.bf16.mxu0 0
    %1296 = vmatpush1.bf16.msra.mxu0 %v540
    %1297 = vmatprep.subr.bf16.mxu0 0
    %1298 = vmatpush1.bf16.msra.mxu0 0
    %1299 = vmatprep.subr.bf16.mxu0 0
    %1300 = vmatpush1.bf16.msra.mxu0 0
    %1301 = vmatprep.subr.bf16.mxu0 0
    %1302 = vmatpush1.bf16.msra.mxu0 0
    %1303 = vmatprep.subr.bf16.mxu0 0
    %1304 = vmatpush1.bf16.msra.mxu0 0
    %1305 = vmatprep.subr.bf16.mxu0 0
    %1306 = vmatpush1.bf16.msra.mxu0 0
    %1307 = vmatprep.subr.bf16.mxu0 0
    %1308 = vmatpush1.bf16.msra.mxu0 0
    %1309 = vmatprep.subr.bf16.mxu0 0
    %1310 = vmatpush1.bf16.msra.mxu0 0
    %1311 = vmatprep.subr.bf16.mxu0 0
    %1312 = vmatpush1.bf16.msra.mxu0 0
    %1313 = vmatprep.mubr.bf16.mxu0 0
    %1314 = vmatmul.mubr.bf16.gmra.mrb[0].mxu0 %v1280
    %v1315 = vpop.f32.mrb[0].mxu0
    %v1316 = vadd.f32 0.0, %v1315
    %v1317 = vpop.f32.mrb[0].mxu0
    %v1318 = vpop.f32.mrb[0].mxu0
    %v1319 = vpop.f32.mrb[0].mxu0
    %1320 = vdwg.mxu0
    %v1321 = vadd.f32 %v1237, %v1316
    %v1322 = vmul.f32 %v1279, 0.5
    %v1323 = vsel %vm377, %v1322, %v1279
    %v1324 = vtanh.pop %v1323
    %v1325 = vadd.f32 %v1324, 1.0
    %v1326 = vmul.f32 %v1325, 0.5
    %v1327 = vsel %vm377, %v1326, %v1324
    %1328 = vrot.lane.b32.xlu0 %v1327, 96
    %v1329 = vpop.permute.xlu0 %1328
    %1330 = vrot.lane.b32.xlu0 %v1327, 64
    %v1331 = vpop.permute.xlu0 %1330
    %1332 = vrot.lane.b32.xlu0 %v1327, 32
    %v1333 = vpop.permute.xlu0 %1332
    %v1334 = vmul.f32 %v1329, %v1214
    %v1335 = vmul.f32 %v1327, %v1333
    %v1336 = vadd.f32 %v1334, %v1335
    %v1337 = vtanh.pop %v1336
    %v1338 = vmul.f32 %v1331, %v1337
    %v1339 = vmul.f32 %v1321, 0.5
    %v1340 = vsel %vm377, %v1339, %v1321
    %v1341 = vtanh.pop %v1340
    %v1342 = vadd.f32 %v1341, 1.0
    %v1343 = vmul.f32 %v1342, 0.5
    %v1344 = vsel %vm377, %v1343, %v1341
    %1345 = vrot.lane.b32.xlu0 %v1344, 96
    %v1346 = vpop.permute.xlu0 %1345
    %1347 = vrot.lane.b32.xlu0 %v1344, 64
    %v1348 = vpop.permute.xlu0 %1347
    %1349 = vrot.lane.b32.xlu0 %v1344, 32
    %v1350 = vpop.permute.xlu0 %1349
    %v1351 = vmul.f32 %v1346, %v1231
    %v1352 = vmul.f32 %v1344, %v1350
    %v1353 = vadd.f32 %v1351, %v1352
    %v1354 = vtanh.pop %v1353
    %v1355 = vmul.f32 %v1348, %v1354
    %v1356 = vadd.f32 %v1234, %v1338
    %v1357 = vadd.f32 %v1235, %v1355
    %v1358 = vld [vmem:[%s371] sm:$0xff]
    %v1359 = vld [vmem:[#allocation3] sm:$0xff]
    %v1360 = vpack.c.bf16 %v1338, %v1338
    %1361 = vmatprep.subr.bf16.mxu0 0
    %1362 = vmatpush1.bf16.msra.mxu0 %v428
    %1363 = vmatprep.subr.bf16.mxu0 0
    %1364 = vmatpush1.bf16.msra.mxu0 %v429
    %1365 = vmatprep.subr.bf16.mxu0 0
    %1366 = vmatpush1.bf16.msra.mxu0 %v430
    %1367 = vmatprep.subr.bf16.mxu0 0
    %1368 = vmatpush1.bf16.msra.mxu0 %v431
    %1369 = vmatprep.subr.bf16.mxu0 0
    %1370 = vmatpush1.bf16.msra.mxu0 %v432
    %1371 = vmatprep.subr.bf16.mxu0 0
    %1372 = vmatpush1.bf16.msra.mxu0 %v433
    %1373 = vmatprep.subr.bf16.mxu0 0
    %1374 = vmatpush1.bf16.msra.mxu0 %v434
    %1375 = vmatprep.subr.bf16.mxu0 0
    %1376 = vmatpush1.bf16.msra.mxu0 %v435
    %1377 = vmatprep.subr.bf16.mxu0 0
    %1378 = vmatpush1.bf16.msra.mxu0 0
    %1379 = vmatprep.subr.bf16.mxu0 0
    %1380 = vmatpush1.bf16.msra.mxu0 0
    %1381 = vmatprep.subr.bf16.mxu0 0
    %1382 = vmatpush1.bf16.msra.mxu0 0
    %1383 = vmatprep.subr.bf16.mxu0 0
    %1384 = vmatpush1.bf16.msra.mxu0 0
    %1385 = vmatprep.subr.bf16.mxu0 0
    %1386 = vmatpush1.bf16.msra.mxu0 0
    %1387 = vmatprep.subr.bf16.mxu0 0
    %1388 = vmatpush1.bf16.msra.mxu0 0
    %1389 = vmatprep.subr.bf16.mxu0 0
    %1390 = vmatpush1.bf16.msra.mxu0 0
    %1391 = vmatprep.subr.bf16.mxu0 0
    %1392 = vmatpush1.bf16.msra.mxu0 0
    %1393 = vmatprep.mubr.bf16.mxu0 0
    %1394 = vmatmul.mubr.bf16.gmra.mrb[0].mxu0 %v1360
    %v1395 = vpop.f32.mrb[0].mxu0
    %v1396 = vadd.f32 0.0, %v1395
    %v1397 = vpop.f32.mrb[0].mxu0
    %v1398 = vpop.f32.mrb[0].mxu0
    %v1399 = vpop.f32.mrb[0].mxu0
    %1400 = vdwg.mxu0
    %v1401 = vadd.f32 %v1358, %v1396
    %v1402 = vpack.c.bf16 %v1355, %v1355
    %1403 = vmatprep.subr.bf16.mxu0 0
    %1404 = vmatpush1.bf16.msra.mxu0 %v533
    %1405 = vmatprep.subr.bf16.mxu0 0
    %1406 = vmatpush1.bf16.msra.mxu0 %v534
    %1407 = vmatprep.subr.bf16.mxu0 0
    %1408 = vmatpush1.bf16.msra.mxu0 %v535
    %1409 = vmatprep.subr.bf16.mxu0 0
    %1410 = vmatpush1.bf16.msra.mxu0 %v536
    %1411 = vmatprep.subr.bf16.mxu0 0
    %1412 = vmatpush1.bf16.msra.mxu0 %v537
    %1413 = vmatprep.subr.bf16.mxu0 0
    %1414 = vmatpush1.bf16.msra.mxu0 %v538
    %1415 = vmatprep.subr.bf16.mxu0 0
    %1416 = vmatpush1.bf16.msra.mxu0 %v539
    %1417 = vmatprep.subr.bf16.mxu0 0
    %1418 = vmatpush1.bf16.msra.mxu0 %v540
    %1419 = vmatprep.subr.bf16.mxu0 0
    %1420 = vmatpush1.bf16.msra.mxu0 0
    %1421 = vmatprep.subr.bf16.mxu0 0
    %1422 = vmatpush1.bf16.msra.mxu0 0
    %1423 = vmatprep.subr.bf16.mxu0 0
    %1424 = vmatpush1.bf16.msra.mxu0 0
    %1425 = vmatprep.subr.bf16.mxu0 0
    %1426 = vmatpush1.bf16.msra.mxu0 0
    %1427 = vmatprep.subr.bf16.mxu0 0
    %1428 = vmatpush1.bf16.msra.mxu0 0
    %1429 = vmatprep.subr.bf16.mxu0 0
    %1430 = vmatpush1.bf16.msra.mxu0 0
    %1431 = vmatprep.subr.bf16.mxu0 0
    %1432 = vmatpush1.bf16.msra.mxu0 0
    %1433 = vmatprep.subr.bf16.mxu0 0
    %1434 = vmatpush1.bf16.msra.mxu0 0
    %1435 = vmatprep.mubr.bf16.mxu0 0
    %1436 = vmatmul.mubr.bf16.gmra.mrb[0].mxu0 %v1402
    %v1437 = vpop.f32.mrb[0].mxu0
    %v1438 = vadd.f32 0.0, %v1437
    %v1439 = vpop.f32.mrb[0].mxu0
    %v1440 = vpop.f32.mrb[0].mxu0
    %v1441 = vpop.f32.mrb[0].mxu0
    %1442 = vdwg.mxu0
    %v1443 = vadd.f32 %v1359, %v1438
    %v1444 = vmul.f32 %v1401, 0.5
    %v1445 = vsel %vm377, %v1444, %v1401
    %v1446 = vtanh.pop %v1445
    %v1447 = vadd.f32 %v1446, 1.0
    %v1448 = vmul.f32 %v1447, 0.5
    %v1449 = vsel %vm377, %v1448, %v1446
    %1450 = vrot.lane.b32.xlu0 %v1449, 96
    %v1451 = vpop.permute.xlu0 %1450
    %1452 = vrot.lane.b32.xlu0 %v1449, 64
    %v1453 = vpop.permute.xlu0 %1452
    %1454 = vrot.lane.b32.xlu0 %v1449, 32
    %v1455 = vpop.permute.xlu0 %1454
    %v1456 = vmul.f32 %v1451, %v1336
    %v1457 = vmul.f32 %v1449, %v1455
    %v1458 = vadd.f32 %v1456, %v1457
    %v1459 = vtanh.pop %v1458
    %v1460 = vmul.f32 %v1453, %v1459
    %v1461 = vmul.f32 %v1443, 0.5
    %v1462 = vsel %vm377, %v1461, %v1443
    %v1463 = vtanh.pop %v1462
    %v1464 = vadd.f32 %v1463, 1.0
    %v1465 = vmul.f32 %v1464, 0.5
    %v1466 = vsel %vm377, %v1465, %v1463
    %1467 = vrot.lane.b32.xlu0 %v1466, 96
    %v1468 = vpop.permute.xlu0 %1467
    %1469 = vrot.lane.b32.xlu0 %v1466, 64
    %v1470 = vpop.permute.xlu0 %1469
    %1471 = vrot.lane.b32.xlu0 %v1466, 32
    %v1472 = vpop.permute.xlu0 %1471
    %v1473 = vmul.f32 %v1468, %v1353
    %v1474 = vmul.f32 %v1466, %v1472
    %v1475 = vadd.f32 %v1473, %v1474
    %v1476 = vtanh.pop %v1475
    %v1477 = vmul.f32 %v1470, %v1476
    %v1478 = vadd.f32 %v1356, %v1460
    %v1479 = vadd.f32 %v1357, %v1477
    %v1480 = vld [vmem:[%s5] sm:$0x1]
    %v1482 = vlaneseq
    %v1483 = vshrl.u32 %v1482, 7
    %v1484 = vsub.s32 0, %v1483
    %v1485 = vrot.slane %v1480, %v1484
    %v1487 = vmul.f32 %v1478, %v1485
    %v1488 = vld [vmem:[%s6] sm:$0x1]
    %v1490 = vlaneseq
    %v1491 = vshrl.u32 %v1490, 7
    %v1492 = vsub.s32 0, %v1491
    %v1493 = vrot.slane %v1488, %v1492
    %v1495 = vmul.f32 %v1479, %v1493
    %v1496 = vadd.f32 %v1487, %v1495
    %1497 = vadd.xlane.f32.xlu0 %v1496
    %v1498 = vpop.xlane.xlu0 %1497
    %v1499 = vmul.f32 %v1498, 0.125
    %v1500 = vld [vmem:[#allocation4] sm:$0x1]
    %v1502 = vlaneseq
    %v1503 = vshrl.u32 %v1502, 7
    %v1504 = vsub.s32 0, %v1503
    %v1505 = vrot.slane %v1500, %v1504
    %v1507 = vadd.f32 %v1499, %v1505
    %1509 = vset.pattern.permute.xlu0 0
    %1510 = vperm.xlu0 %1509, %v1507
    %v1511 = vpop.permute.xlu0 %1510
    %1513 = vst [vmem:[%s8] sm:$0xff] %v1511
    // Predicated region
    $region38: #{bilstm_forward.1} parent=1 // pred_check
      _
    $region39: #{bilstm_forward.1} parent=1 // pred_check_branch
      %1515 = sbr.rel (0) target = $region41
    $region40: #{bilstm_forward.1} parent=1 // pred_region
      _
    $region41: #{bilstm_forward.1} parent=1 // pred_fallthru
      _
    // Predicated region
    $region42: #{bilstm_forward.1} parent=1 // pred_check
      _
    $region43: #{bilstm_forward.1} parent=1 // pred_check_branch
      %1517 = sbr.rel (0) target = $region45
    $region44: #{bilstm_forward.1} parent=1 // pred_region
      _
    $region45: #{bilstm_forward.1} parent=1 // pred_fallthru
      _
    %1518 = vsyncpa [#allocation6], 1

</llo_original>
